<compile_context>
chip_gen: v5e
topology: v5e:2x2
jax: 0.10.0
libtpu: 0.0.40
codegen_flags: <defaults>
</compile_context>

<pallas_src>
import jax
import jax.numpy as jnp
from jax.experimental import pallas as pl
from jax.experimental.pallas import tpu as pltpu


def _device_kind():
    return jax.devices()[0].device_kind.lower()


def _bf16_act_supported(kind=None):
    # bf16 VPU/EUP exists on v6e/v7x; v5e (and older) have no bf16 vector path.
    kind = kind if kind is not None else _device_kind()
    return ("v6" in kind) or ("v7" in kind)


def _softplus(z):
    # Branch-free softplus: max(z, 0) + log1p(exp(-|z|)).
    # Matches torch.nn.Softplus(beta=1, threshold=20) to within rounding
    # (for z > 20 the log1p term is < 2e-9).
    return jnp.maximum(z, 0.0) + jnp.log1p(jnp.exp(-jnp.abs(z)))


def _make_kernel(act_dtype):
    """act_dtype: dtype used for bias-cast + softplus + inter-layer
    activations of layers 1-6 (bf16 on v6e/v7x, f32 on v5e).  Layer 7 and
    the output store always run in f32."""

    def kernel(x_ref,
               w1_ref, b1_ref, w2_ref, b2_ref, w3_ref, b3_ref,
               w4_ref, b4_ref, w5_ref, b5_ref, w6_ref, b6_ref,
               w7_ref, b7_ref,
               o_ref):
        # Channels-first: activations are (C, tm); tm (mult. of 128) on lanes.
        x_f32 = x_ref[...]                       # (C_in, tm) f32
        x = x_f32.astype(jnp.bfloat16)           # in-kernel cast (MXU operand)
        c_in = x.shape[0]

        def layer(h, w_ref, b_ref, out_dt):
            # W^T is (cout, cin) bf16; MXU matmul with f32 accumulation;
            # bias add in f32, then softplus in out_dt (bf16 on v6e/v7x).
            z = jnp.dot(w_ref[...], h.astype(jnp.bfloat16),
                        preferred_element_type=jnp.float32) + b_ref[...]
            return _softplus(z.astype(out_dt))

        x1 = layer(x,  w1_ref, b1_ref, act_dtype)
        x2 = layer(x1, w2_ref, b2_ref, act_dtype)
        x3 = layer(x2, w3_ref, b3_ref, act_dtype)
        x4 = layer(x3, w4_ref, b4_ref, act_dtype)

        # conv5 acts on cat([x, x4], channel dim).  Instead of materializing
        # the concat, split W5^T column-wise: first c_in columns hit x, the
        # rest hit x4.
        w5 = w5_ref[...]
        z5 = (jnp.dot(w5[:, :c_in], x, preferred_element_type=jnp.float32)
              + jnp.dot(w5[:, c_in:], x4.astype(jnp.bfloat16),
                        preferred_element_type=jnp.float32)
              + b5_ref[...])
        x5 = _softplus(z5.astype(act_dtype))

        x6 = layer(x5, w6_ref, b6_ref, act_dtype)
        x7 = layer(x6, w7_ref, b7_ref, jnp.float32)   # final layer in f32

        o_ref[...] = x7.astype(o_ref.dtype)           # lane-dense store

    return kernel


def offset_decoder_pallas(x_cm, fused_params, *, hsize, tm=8192,
                          out_dtype=jnp.float32):
    """x_cm: [C_in, M] f32 channels-first slab (M = B*N).
    fused_params: 7 x (W [cin, cout] f32, b [1, cout] f32), BN already folded.
    Returns [hsize, M] in `out_dtype` (pass bf16 to halve HBM writeback if
    the consumer can accept it)."""
    c_in, M = x_cm.shape

    kind = _device_kind()
    is_v7x = "v7" in kind
    use_bf16_act = _bf16_act_supported(kind)
    act_dtype = jnp.bfloat16 if use_bf16_act else jnp.float32

    # ---- tile-size selection + ragged-M handling (lane axis) ----
    m_pad128 = ((M + 127) // 128) * 128
    tm_eff = max(128, (min(tm, m_pad128) // 128) * 128)
    # Megacore split only where it pays: v7x has 2 TensorCores, and only when
    # per-step work is well above the ~0.35us fixed grid-step overhead.
    if is_v7x and (m_pad128 // tm_eff) < 2 and m_pad128 >= 2048:
        tm_eff = max(1024, ((m_pad128 // 2) // 128) * 128)
    m_total = ((M + tm_eff - 1) // tm_eff) * tm_eff

    # Input stays f32; the bf16 cast happens inside the kernel, so there is no
    # extra wrapper-side HBM cast pass.  Padding only when M is ragged.
    x_in = x_cm
    if m_total != M:
        x_in = jnp.pad(x_in, ((0, 0), (0, m_total - M)))

    # ---- weights: pre-transposed (cout, cin) bf16; bias (cout, 1) f32 ----
    weight_inputs = []
    in_specs = [pl.BlockSpec((c_in, tm_eff), lambda i: (0, i))]
    for (w, b) in fused_params:
        wT = jnp.asarray(w, jnp.float32).T.astype(jnp.bfloat16)   # (cout, cin)
        bc = jnp.asarray(b, jnp.float32).reshape(-1, 1)           # (cout, 1)
        weight_inputs += [wT, bc]
        # Constant block index (0, 0) -> Pallas keeps the block resident and
        # skips re-DMA across grid steps; all weights together are ~15 KiB.
        in_specs += [
            pl.BlockSpec(wT.shape, lambda i: (0, 0)),
            pl.BlockSpec(bc.shape, lambda i: (0, 0)),
        ]

    # ---- device-aware VMEM budget ----
    w_bytes = sum(int(a.size) * a.dtype.itemsize for a in weight_inputs)
    out_bytes = jnp.dtype(out_dtype).itemsize
    est = (2 * c_in * tm_eff * 4              # double-buffered f32 input tile
           + 2 * hsize * tm_eff * out_bytes   # double-buffered output tile
           + 12 * hsize * tm_eff * 4          # live activation temps (f32 bound)
           + 2 * w_bytes)
    # Physical VMEM: 128 MiB (v5e/v6e), 64 MiB per TC (v7x) -> leave headroom.
    vmem_cap = (48 << 20) if is_v7x else (100 << 20)
    vmem_limit = int(min(vmem_cap, max(32 << 20, est + (8 << 20))))

    out = pl.pallas_call(
        _make_kernel(act_dtype),
        out_shape=jax.ShapeDtypeStruct((hsize, m_total), out_dtype),
        grid_spec=pltpu.PrefetchScalarGridSpec(
            num_scalar_prefetch=0,
            grid=(m_total // tm_eff,),
            in_specs=in_specs,
            out_specs=pl.BlockSpec((hsize, tm_eff), lambda i: (0, i)),
        ),
        compiler_params=pltpu.CompilerParams(
            dimension_semantics=("parallel",),
            vmem_limit_bytes=vmem_limit),
    )(x_in, *weight_inputs)
    # Padded lane columns hold softplus(bias) garbage; they are sliced off here.
    return out[:, :M]


def make_params(key, in_size, hsize):
    """Deterministic synthetic parameters (PyTorch shapes), BN folded into conv."""
    eps = 1e-5
    layer_dims = [
        (in_size, hsize),           # conv1
        (hsize, hsize),             # conv2
        (hsize, hsize),             # conv3
        (hsize, hsize),             # conv4
        (hsize + in_size, hsize),   # conv5 (skip concat)
        (hsize, hsize),             # conv6
        (hsize, hsize),             # conv7
    ]
    fused = []
    for (cin, cout) in layer_dims:
        key, kw, kb, kg, kbe, km, kv = jax.random.split(key, 7)
        # conv weight (out, in, 1) -> stored transposed as (in, out)
        w = jax.random.normal(kw, (cin, cout), jnp.float32) * 0.1
        b = jax.random.normal(kb, (1, cout), jnp.float32) * 0.1
        # BatchNorm1d params / running stats (inference mode)
        gamma = 1.0 + 0.1 * jax.random.normal(kg, (cout,), jnp.float32)
        beta = 0.1 * jax.random.normal(kbe, (cout,), jnp.float32)
        run_mean = 0.1 * jax.random.normal(km, (cout,), jnp.float32)
        run_var = jnp.abs(jax.random.normal(kv, (cout,), jnp.float32)) + 0.5
        # Fold BN:  bn(y) = y*s + t,  s = gamma/sqrt(var+eps), t = beta - mean*s
        s = gamma / jnp.sqrt(run_var + eps)
        t = beta - run_mean * s
        w_f = w * s[None, :]
        b_f = b * s[None, :] + t[None, :]
        fused.append((w_f, b_f))
    return fused


def reference_forward(x_ncl, fused_params):
    """Pure-JAX f32 reference of the fused module forward.
    x_ncl: (B, C_in, N) PyTorch layout.  Returns (B, hsize, N)."""
    (w1, b1), (w2, b2), (w3, b3), (w4, b4), (w5, b5), (w6, b6), (w7, b7) = fused_params
    B, c_in, N = x_ncl.shape
    x = jnp.moveaxis(x_ncl, 1, 2).reshape(B * N, c_in)     # channels-last flat
    sp = lambda z: jnp.maximum(z, 0.0) + jnp.log1p(jnp.exp(-jnp.abs(z)))
    x1 = sp(x @ w1 + b1)
    x2 = sp(x1 @ w2 + b2)
    x3 = sp(x2 @ w3 + b3)
    x4 = sp(x3 @ w4 + b4)
    cat = jnp.concatenate([x, x4], axis=1)
    x5 = sp(cat @ w5 + b5)
    x6 = sp(x5 @ w6 + b6)
    x7 = sp(x6 @ w7 + b7)
    hsize = x7.shape[1]
    return jnp.moveaxis(x7.reshape(B, N, hsize), 1, 2)     # (B, hsize, N)


if __name__ == "__main__":
    # Small shapes consistent with the module: batch=2, in_size=16 channels,
    # num points N=200 (deliberately ragged, not a tile multiple), hidden=32.
    B, C_IN, N, HSIZE = 2, 16, 200, 32

    key = jax.random.PRNGKey(0)
    key, kx = jax.random.split(key)
    x_ncl = jax.random.normal(kx, (B, C_IN, N), jnp.float32)   # PyTorch (B, C, L)

    fused_params = make_params(key, C_IN, HSIZE)
    # TODO(synk): BatchNorm training-mode (batch-statistics) path is not
    # implemented; running-stats inference folding only.

    # channels-first slab [C_in, M], M = B*N (points on the lane axis)
    x_cm = jnp.moveaxis(x_ncl, 1, 0).reshape(C_IN, B * N)

    out_cm = offset_decoder_pallas(x_cm, fused_params, hsize=HSIZE, tm=8192)
    out_cm = jax.block_until_ready(out_cm)

    # already channel-first: just unflatten to PyTorch (B, HSIZE, N)
    out_bcn = jnp.moveaxis(out_cm.reshape(HSIZE, B, N), 0, 1)

    # correctness check against pure-JAX f32 reference.  bf16 MXU operands
    # everywhere; on v6e/v7x the layer 1-6 activations/softplus also run in
    # bf16, so relax the tolerance slightly further on those parts.
    ref_bcn = reference_forward(x_ncl, fused_params)
    assert out_bcn.shape == ref_bcn.shape
    tol = 1e-1 if _bf16_act_supported() else 5e-2
    assert jnp.allclose(out_bcn, ref_bcn, atol=tol, rtol=tol), "mismatch vs reference"

    _ = jax.block_until_ready(out_bcn)
    print("KERNEL_OK")
</pallas_src>

<mosaic_0001>
module attributes {stable_mosaic.version = 11 : i64} {
  func.func @kernel(%arg0: i32, %arg1: memref<16x512xf32, #tpu.memory_space<vmem>>, %arg2: memref<32x16xbf16, #tpu.memory_space<vmem>>, %arg3: memref<32x1xf32, #tpu.memory_space<vmem>>, %arg4: memref<32x32xbf16, #tpu.memory_space<vmem>>, %arg5: memref<32x1xf32, #tpu.memory_space<vmem>>, %arg6: memref<32x32xbf16, #tpu.memory_space<vmem>>, %arg7: memref<32x1xf32, #tpu.memory_space<vmem>>, %arg8: memref<32x32xbf16, #tpu.memory_space<vmem>>, %arg9: memref<32x1xf32, #tpu.memory_space<vmem>>, %arg10: memref<32x48xbf16, #tpu.memory_space<vmem>>, %arg11: memref<32x1xf32, #tpu.memory_space<vmem>>, %arg12: memref<32x32xbf16, #tpu.memory_space<vmem>>, %arg13: memref<32x1xf32, #tpu.memory_space<vmem>>, %arg14: memref<32x32xbf16, #tpu.memory_space<vmem>>, %arg15: memref<32x1xf32, #tpu.memory_space<vmem>>, %arg16: memref<32x512xf32, #tpu.memory_space<vmem>>) attributes {dimension_semantics = [#tpu.dimension_semantics<parallel>], iteration_bounds = array<i64: 1>, scalar_prefetch = 0 : i64, scratch_operands = 0 : i64, tpu.core_type = #tpu.core_type<tc>, window_params = [{transform_indices = @transform_0, window_bounds = array<i64: 16, 512>}, {pipeline_mode = #tpu.pipeline_mode<synchronous>, transform_indices = @transform_1, window_bounds = array<i64: 32, 16>}, {pipeline_mode = #tpu.pipeline_mode<synchronous>, transform_indices = @transform_2, window_bounds = array<i64: 32, 1>}, {pipeline_mode = #tpu.pipeline_mode<synchronous>, transform_indices = @transform_3, window_bounds = array<i64: 32, 32>}, {pipeline_mode = #tpu.pipeline_mode<synchronous>, transform_indices = @transform_4, window_bounds = array<i64: 32, 1>}, {pipeline_mode = #tpu.pipeline_mode<synchronous>, transform_indices = @transform_5, window_bounds = array<i64: 32, 32>}, {pipeline_mode = #tpu.pipeline_mode<synchronous>, transform_indices = @transform_6, window_bounds = array<i64: 32, 1>}, {pipeline_mode = #tpu.pipeline_mode<synchronous>, transform_indices = @transform_7, window_bounds = array<i64: 32, 32>}, {pipeline_mode = #tpu.pipeline_mode<synchronous>, transform_indices = @transform_8, window_bounds = array<i64: 32, 1>}, {pipeline_mode = #tpu.pipeline_mode<synchronous>, transform_indices = @transform_9, window_bounds = array<i64: 32, 48>}, {pipeline_mode = #tpu.pipeline_mode<synchronous>, transform_indices = @transform_10, window_bounds = array<i64: 32, 1>}, {pipeline_mode = #tpu.pipeline_mode<synchronous>, transform_indices = @transform_11, window_bounds = array<i64: 32, 32>}, {pipeline_mode = #tpu.pipeline_mode<synchronous>, transform_indices = @transform_12, window_bounds = array<i64: 32, 1>}, {pipeline_mode = #tpu.pipeline_mode<synchronous>, transform_indices = @transform_13, window_bounds = array<i64: 32, 32>}, {pipeline_mode = #tpu.pipeline_mode<synchronous>, transform_indices = @transform_14, window_bounds = array<i64: 32, 1>}, {transform_indices = @transform_15, window_bounds = array<i64: 32, 512>}]} {
    %c0 = arith.constant 0 : index
    %c0_0 = arith.constant 0 : index
    %0 = vector.load %arg1[%c0, %c0_0] : memref<16x512xf32, #tpu.memory_space<vmem>>, vector<16x512xf32>
    %1 = arith.truncf %0 : vector<16x512xf32> to vector<16x512xbf16>
    %c0_1 = arith.constant 0 : index
    %c0_2 = arith.constant 0 : index
    %2 = vector.load %arg2[%c0_1, %c0_2] : memref<32x16xbf16, #tpu.memory_space<vmem>>, vector<32x16xbf16>
    %cst = arith.constant dense<0.000000e+00> : vector<32x512xf32>
    %3 = tpu.matmul %2, %1, %cst {dimension_numbers = #tpu.dot_dimension_numbers<[1], [0], [0], [1], [0, 0, 1, 1], [], []>} : vector<32x16xbf16>, vector<16x512xbf16>, vector<32x512xf32> -> vector<32x512xf32>
    %c0_3 = arith.constant 0 : index
    %c0_4 = arith.constant 0 : index
    %4 = vector.load %arg3[%c0_3, %c0_4] : memref<32x1xf32, #tpu.memory_space<vmem>>, vector<32x1xf32>
    %5 = vector.broadcast %4 : vector<32x1xf32> to vector<32x512xf32>
    %6 = arith.addf %3, %5 : vector<32x512xf32>
    %cst_5 = arith.constant 0.000000e+00 : f32
    %7 = vector.broadcast %cst_5 : f32 to vector<32x512xf32>
    %8 = arith.maximumf %6, %7 : vector<32x512xf32>
    %9 = math.absf %6 : vector<32x512xf32>
    %cst_6 = arith.constant 0.000000e+00 : f32
    %10 = vector.broadcast %cst_6 : f32 to vector<32x512xf32>
    %11 = arith.subf %10, %9 : vector<32x512xf32>
    %12 = math.exp %11 : vector<32x512xf32>
    %13 = math.log1p %12 : vector<32x512xf32>
    %14 = arith.addf %8, %13 : vector<32x512xf32>
    %c0_7 = arith.constant 0 : index
    %c0_8 = arith.constant 0 : index
    %15 = vector.load %arg4[%c0_7, %c0_8] : memref<32x32xbf16, #tpu.memory_space<vmem>>, vector<32x32xbf16>
    %16 = arith.truncf %14 : vector<32x512xf32> to vector<32x512xbf16>
    %cst_9 = arith.constant dense<0.000000e+00> : vector<32x512xf32>
    %17 = tpu.matmul %15, %16, %cst_9 {dimension_numbers = #tpu.dot_dimension_numbers<[1], [0], [0], [1], [0, 0, 1, 1], [], []>} : vector<32x32xbf16>, vector<32x512xbf16>, vector<32x512xf32> -> vector<32x512xf32>
    %c0_10 = arith.constant 0 : index
    %c0_11 = arith.constant 0 : index
    %18 = vector.load %arg5[%c0_10, %c0_11] : memref<32x1xf32, #tpu.memory_space<vmem>>, vector<32x1xf32>
    %19 = vector.broadcast %18 : vector<32x1xf32> to vector<32x512xf32>
    %20 = arith.addf %17, %19 : vector<32x512xf32>
    %cst_12 = arith.constant 0.000000e+00 : f32
    %21 = vector.broadcast %cst_12 : f32 to vector<32x512xf32>
    %22 = arith.maximumf %20, %21 : vector<32x512xf32>
    %23 = math.absf %20 : vector<32x512xf32>
    %cst_13 = arith.constant 0.000000e+00 : f32
    %24 = vector.broadcast %cst_13 : f32 to vector<32x512xf32>
    %25 = arith.subf %24, %23 : vector<32x512xf32>
    %26 = math.exp %25 : vector<32x512xf32>
    %27 = math.log1p %26 : vector<32x512xf32>
    %28 = arith.addf %22, %27 : vector<32x512xf32>
    %c0_14 = arith.constant 0 : index
    %c0_15 = arith.constant 0 : index
    %29 = vector.load %arg6[%c0_14, %c0_15] : memref<32x32xbf16, #tpu.memory_space<vmem>>, vector<32x32xbf16>
    %30 = arith.truncf %28 : vector<32x512xf32> to vector<32x512xbf16>
    %cst_16 = arith.constant dense<0.000000e+00> : vector<32x512xf32>
    %31 = tpu.matmul %29, %30, %cst_16 {dimension_numbers = #tpu.dot_dimension_numbers<[1], [0], [0], [1], [0, 0, 1, 1], [], []>} : vector<32x32xbf16>, vector<32x512xbf16>, vector<32x512xf32> -> vector<32x512xf32>
    %c0_17 = arith.constant 0 : index
    %c0_18 = arith.constant 0 : index
    %32 = vector.load %arg7[%c0_17, %c0_18] : memref<32x1xf32, #tpu.memory_space<vmem>>, vector<32x1xf32>
    %33 = vector.broadcast %32 : vector<32x1xf32> to vector<32x512xf32>
    %34 = arith.addf %31, %33 : vector<32x512xf32>
    %cst_19 = arith.constant 0.000000e+00 : f32
    %35 = vector.broadcast %cst_19 : f32 to vector<32x512xf32>
    %36 = arith.maximumf %34, %35 : vector<32x512xf32>
    %37 = math.absf %34 : vector<32x512xf32>
    %cst_20 = arith.constant 0.000000e+00 : f32
    %38 = vector.broadcast %cst_20 : f32 to vector<32x512xf32>
    %39 = arith.subf %38, %37 : vector<32x512xf32>
    %40 = math.exp %39 : vector<32x512xf32>
    %41 = math.log1p %40 : vector<32x512xf32>
    %42 = arith.addf %36, %41 : vector<32x512xf32>
    %c0_21 = arith.constant 0 : index
    %c0_22 = arith.constant 0 : index
    %43 = vector.load %arg8[%c0_21, %c0_22] : memref<32x32xbf16, #tpu.memory_space<vmem>>, vector<32x32xbf16>
    %44 = arith.truncf %42 : vector<32x512xf32> to vector<32x512xbf16>
    %cst_23 = arith.constant dense<0.000000e+00> : vector<32x512xf32>
    %45 = tpu.matmul %43, %44, %cst_23 {dimension_numbers = #tpu.dot_dimension_numbers<[1], [0], [0], [1], [0, 0, 1, 1], [], []>} : vector<32x32xbf16>, vector<32x512xbf16>, vector<32x512xf32> -> vector<32x512xf32>
    %c0_24 = arith.constant 0 : index
    %c0_25 = arith.constant 0 : index
    %46 = vector.load %arg9[%c0_24, %c0_25] : memref<32x1xf32, #tpu.memory_space<vmem>>, vector<32x1xf32>
    %47 = vector.broadcast %46 : vector<32x1xf32> to vector<32x512xf32>
    %48 = arith.addf %45, %47 : vector<32x512xf32>
    %cst_26 = arith.constant 0.000000e+00 : f32
    %49 = vector.broadcast %cst_26 : f32 to vector<32x512xf32>
    %50 = arith.maximumf %48, %49 : vector<32x512xf32>
    %51 = math.absf %48 : vector<32x512xf32>
    %cst_27 = arith.constant 0.000000e+00 : f32
    %52 = vector.broadcast %cst_27 : f32 to vector<32x512xf32>
    %53 = arith.subf %52, %51 : vector<32x512xf32>
    %54 = math.exp %53 : vector<32x512xf32>
    %55 = math.log1p %54 : vector<32x512xf32>
    %56 = arith.addf %50, %55 : vector<32x512xf32>
    %c0_28 = arith.constant 0 : index
    %c0_29 = arith.constant 0 : index
    %57 = vector.load %arg10[%c0_28, %c0_29] : memref<32x48xbf16, #tpu.memory_space<vmem>>, vector<32x48xbf16>
    %58 = vector.extract_strided_slice %57 {offsets = [0, 0], sizes = [32, 16], strides = [1, 1]} : vector<32x48xbf16> to vector<32x16xbf16>
    %cst_30 = arith.constant dense<0.000000e+00> : vector<32x512xf32>
    %59 = tpu.matmul %58, %1, %cst_30 {dimension_numbers = #tpu.dot_dimension_numbers<[1], [0], [0], [1], [0, 0, 1, 1], [], []>} : vector<32x16xbf16>, vector<16x512xbf16>, vector<32x512xf32> -> vector<32x512xf32>
    %60 = vector.extract_strided_slice %57 {offsets = [0, 16], sizes = [32, 32], strides = [1, 1]} : vector<32x48xbf16> to vector<32x32xbf16>
    %61 = arith.truncf %56 : vector<32x512xf32> to vector<32x512xbf16>
    %cst_31 = arith.constant dense<0.000000e+00> : vector<32x512xf32>
    %62 = tpu.matmul %60, %61, %cst_31 {dimension_numbers = #tpu.dot_dimension_numbers<[1], [0], [0], [1], [0, 0, 1, 1], [], []>} : vector<32x32xbf16>, vector<32x512xbf16>, vector<32x512xf32> -> vector<32x512xf32>
    %63 = arith.addf %59, %62 : vector<32x512xf32>
    %c0_32 = arith.constant 0 : index
    %c0_33 = arith.constant 0 : index
    %64 = vector.load %arg11[%c0_32, %c0_33] : memref<32x1xf32, #tpu.memory_space<vmem>>, vector<32x1xf32>
    %65 = vector.broadcast %64 : vector<32x1xf32> to vector<32x512xf32>
    %66 = arith.addf %63, %65 : vector<32x512xf32>
    %cst_34 = arith.constant 0.000000e+00 : f32
    %67 = vector.broadcast %cst_34 : f32 to vector<32x512xf32>
    %68 = arith.maximumf %66, %67 : vector<32x512xf32>
    %69 = math.absf %66 : vector<32x512xf32>
    %cst_35 = arith.constant 0.000000e+00 : f32
    %70 = vector.broadcast %cst_35 : f32 to vector<32x512xf32>
    %71 = arith.subf %70, %69 : vector<32x512xf32>
    %72 = math.exp %71 : vector<32x512xf32>
    %73 = math.log1p %72 : vector<32x512xf32>
    %74 = arith.addf %68, %73 : vector<32x512xf32>
    %c0_36 = arith.constant 0 : index
    %c0_37 = arith.constant 0 : index
    %75 = vector.load %arg12[%c0_36, %c0_37] : memref<32x32xbf16, #tpu.memory_space<vmem>>, vector<32x32xbf16>
    %76 = arith.truncf %74 : vector<32x512xf32> to vector<32x512xbf16>
    %cst_38 = arith.constant dense<0.000000e+00> : vector<32x512xf32>
    %77 = tpu.matmul %75, %76, %cst_38 {dimension_numbers = #tpu.dot_dimension_numbers<[1], [0], [0], [1], [0, 0, 1, 1], [], []>} : vector<32x32xbf16>, vector<32x512xbf16>, vector<32x512xf32> -> vector<32x512xf32>
    %c0_39 = arith.constant 0 : index
    %c0_40 = arith.constant 0 : index
    %78 = vector.load %arg13[%c0_39, %c0_40] : memref<32x1xf32, #tpu.memory_space<vmem>>, vector<32x1xf32>
    %79 = vector.broadcast %78 : vector<32x1xf32> to vector<32x512xf32>
    %80 = arith.addf %77, %79 : vector<32x512xf32>
    %cst_41 = arith.constant 0.000000e+00 : f32
    %81 = vector.broadcast %cst_41 : f32 to vector<32x512xf32>
    %82 = arith.maximumf %80, %81 : vector<32x512xf32>
    %83 = math.absf %80 : vector<32x512xf32>
    %cst_42 = arith.constant 0.000000e+00 : f32
    %84 = vector.broadcast %cst_42 : f32 to vector<32x512xf32>
    %85 = arith.subf %84, %83 : vector<32x512xf32>
    %86 = math.exp %85 : vector<32x512xf32>
    %87 = math.log1p %86 : vector<32x512xf32>
    %88 = arith.addf %82, %87 : vector<32x512xf32>
    %c0_43 = arith.constant 0 : index
    %c0_44 = arith.constant 0 : index
    %89 = vector.load %arg14[%c0_43, %c0_44] : memref<32x32xbf16, #tpu.memory_space<vmem>>, vector<32x32xbf16>
    %90 = arith.truncf %88 : vector<32x512xf32> to vector<32x512xbf16>
    %cst_45 = arith.constant dense<0.000000e+00> : vector<32x512xf32>
    %91 = tpu.matmul %89, %90, %cst_45 {dimension_numbers = #tpu.dot_dimension_numbers<[1], [0], [0], [1], [0, 0, 1, 1], [], []>} : vector<32x32xbf16>, vector<32x512xbf16>, vector<32x512xf32> -> vector<32x512xf32>
    %c0_46 = arith.constant 0 : index
    %c0_47 = arith.constant 0 : index
    %92 = vector.load %arg15[%c0_46, %c0_47] : memref<32x1xf32, #tpu.memory_space<vmem>>, vector<32x1xf32>
    %93 = vector.broadcast %92 : vector<32x1xf32> to vector<32x512xf32>
    %94 = arith.addf %91, %93 : vector<32x512xf32>
    %cst_48 = arith.constant 0.000000e+00 : f32
    %95 = vector.broadcast %cst_48 : f32 to vector<32x512xf32>
    %96 = arith.maximumf %94, %95 : vector<32x512xf32>
    %97 = math.absf %94 : vector<32x512xf32>
    %cst_49 = arith.constant 0.000000e+00 : f32
    %98 = vector.broadcast %cst_49 : f32 to vector<32x512xf32>
    %99 = arith.subf %98, %97 : vector<32x512xf32>
    %100 = math.exp %99 : vector<32x512xf32>
    %101 = math.log1p %100 : vector<32x512xf32>
    %102 = arith.addf %96, %101 : vector<32x512xf32>
    %c0_50 = arith.constant 0 : index
    %c0_51 = arith.constant 0 : index
    %103 = vector.load %arg16[%c0_50, %c0_51] : memref<32x512xf32, #tpu.memory_space<vmem>>, vector<32x512xf32>
    tpu.vector_store %arg16[%c0_50, %c0_51], %102 {strides = array<i32>} : memref<32x512xf32, #tpu.memory_space<vmem>>, vector<32x512xf32>,
    return
  }
  func.func @transform_0(%arg0: i32) -> (i32, i32) {
    %c0_i32 = arith.constant 0 : i32
    %c0_i32_0 = arith.constant 0 : i32
    return %c0_i32, %arg0 : i32, i32
  }
  func.func @transform_1(%arg0: i32) -> (i32, i32) {
    %c0_i32 = arith.constant 0 : i32
    %c0_i32_0 = arith.constant 0 : i32
    %c0_i32_1 = arith.constant 0 : i32
    return %c0_i32, %c0_i32_0 : i32, i32
  }
  func.func @transform_2(%arg0: i32) -> (i32, i32) {
    %c0_i32 = arith.constant 0 : i32
    %c0_i32_0 = arith.constant 0 : i32
    %c0_i32_1 = arith.constant 0 : i32
    return %c0_i32, %c0_i32_0 : i32, i32
  }
  func.func @transform_3(%arg0: i32) -> (i32, i32) {
    %c0_i32 = arith.constant 0 : i32
    %c0_i32_0 = arith.constant 0 : i32
    %c0_i32_1 = arith.constant 0 : i32
    return %c0_i32, %c0_i32_0 : i32, i32
  }
  func.func @transform_4(%arg0: i32) -> (i32, i32) {
    %c0_i32 = arith.constant 0 : i32
    %c0_i32_0 = arith.constant 0 : i32
    %c0_i32_1 = arith.constant 0 : i32
    return %c0_i32, %c0_i32_0 : i32, i32
  }
  func.func @transform_5(%arg0: i32) -> (i32, i32) {
    %c0_i32 = arith.constant 0 : i32
    %c0_i32_0 = arith.constant 0 : i32
    %c0_i32_1 = arith.constant 0 : i32
    return %c0_i32, %c0_i32_0 : i32, i32
  }
  func.func @transform_6(%arg0: i32) -> (i32, i32) {
    %c0_i32 = arith.constant 0 : i32
    %c0_i32_0 = arith.constant 0 : i32
    %c0_i32_1 = arith.constant 0 : i32
    return %c0_i32, %c0_i32_0 : i32, i32
  }
  func.func @transform_7(%arg0: i32) -> (i32, i32) {
    %c0_i32 = arith.constant 0 : i32
    %c0_i32_0 = arith.constant 0 : i32
    %c0_i32_1 = arith.constant 0 : i32
    return %c0_i32, %c0_i32_0 : i32, i32
  }
  func.func @transform_8(%arg0: i32) -> (i32, i32) {
    %c0_i32 = arith.constant 0 : i32
    %c0_i32_0 = arith.constant 0 : i32
    %c0_i32_1 = arith.constant 0 : i32
    return %c0_i32, %c0_i32_0 : i32, i32
  }
  func.func @transform_9(%arg0: i32) -> (i32, i32) {
    %c0_i32 = arith.constant 0 : i32
    %c0_i32_0 = arith.constant 0 : i32
    %c0_i32_1 = arith.constant 0 : i32
    return %c0_i32, %c0_i32_0 : i32, i32
  }
  func.func @transform_10(%arg0: i32) -> (i32, i32) {
    %c0_i32 = arith.constant 0 : i32
    %c0_i32_0 = arith.constant 0 : i32
    %c0_i32_1 = arith.constant 0 : i32
    return %c0_i32, %c0_i32_0 : i32, i32
  }
  func.func @transform_11(%arg0: i32) -> (i32, i32) {
    %c0_i32 = arith.constant 0 : i32
    %c0_i32_0 = arith.constant 0 : i32
    %c0_i32_1 = arith.constant 0 : i32
    return %c0_i32, %c0_i32_0 : i32, i32
  }
  func.func @transform_12(%arg0: i32) -> (i32, i32) {
    %c0_i32 = arith.constant 0 : i32
    %c0_i32_0 = arith.constant 0 : i32
    %c0_i32_1 = arith.constant 0 : i32
    return %c0_i32, %c0_i32_0 : i32, i32
  }
  func.func @transform_13(%arg0: i32) -> (i32, i32) {
    %c0_i32 = arith.constant 0 : i32
    %c0_i32_0 = arith.constant 0 : i32
    %c0_i32_1 = arith.constant 0 : i32
    return %c0_i32, %c0_i32_0 : i32, i32
  }
  func.func @transform_14(%arg0: i32) -> (i32, i32) {
    %c0_i32 = arith.constant 0 : i32
    %c0_i32_0 = arith.constant 0 : i32
    %c0_i32_1 = arith.constant 0 : i32
    return %c0_i32, %c0_i32_0 : i32, i32
  }
  func.func @transform_15(%arg0: i32) -> (i32, i32) {
    %c0_i32 = arith.constant 0 : i32
    %c0_i32_0 = arith.constant 0 : i32
    return %c0_i32, %arg0 : i32, i32
  }
}

</mosaic_0001>

<llo_original>
// kernel: tpu_custom_call.1
$region0: #{tpu_custom_call.1}
  #allocation0 [shape = 'u32[]', space=smem, size = 0x4, offset = 0x4, fixed_abs, tag = 'smem constant byte address 0x4 - core index']
  #allocation1 [shape = 'u32[72,128]{1,0:T(1,128)}', space=vmem, size = 0x9000, scoped, tag = 'internal scratch']
  %s0 = inlined_call_operand.vmem [shape: f32[16,512], index: 0, kind: input, shape index: {}]
  %s1 = inlined_call_operand.vmem [shape: bf16[32,16], index: 1, kind: input, shape index: {}]
  %s2 = inlined_call_operand.vmem [shape: f32[32,1], index: 2, kind: input, shape index: {}]
  %s3 = inlined_call_operand.vmem [shape: bf16[32,32], index: 3, kind: input, shape index: {}]
  %s4 = inlined_call_operand.vmem [shape: f32[32,1], index: 4, kind: input, shape index: {}]
  %s5 = inlined_call_operand.vmem [shape: bf16[32,32], index: 5, kind: input, shape index: {}]
  %s6 = inlined_call_operand.vmem [shape: f32[32,1], index: 6, kind: input, shape index: {}]
  %s7 = inlined_call_operand.vmem [shape: bf16[32,32], index: 7, kind: input, shape index: {}]
  %s8 = inlined_call_operand.vmem [shape: f32[32,1], index: 8, kind: input, shape index: {}]
  %s9 = inlined_call_operand.vmem [shape: bf16[32,48], index: 9, kind: input, shape index: {}]
  %s10 = inlined_call_operand.vmem [shape: f32[32,1], index: 10, kind: input, shape index: {}]
  %s11 = inlined_call_operand.vmem [shape: bf16[32,32], index: 11, kind: input, shape index: {}]
  %s12 = inlined_call_operand.vmem [shape: f32[32,1], index: 12, kind: input, shape index: {}]
  %s13 = inlined_call_operand.vmem [shape: bf16[32,32], index: 13, kind: input, shape index: {}]
  %s14 = inlined_call_operand.vmem [shape: f32[32,1], index: 14, kind: input, shape index: {}]
  %s15 = inlined_call_operand.hbm [shape: f32[32,512], index: 15, kind: output, shape index: {}]
  %s16 = sld [smem:[#allocation0]]
  $region70: #{tpu_custom_call.1} parent=0
    _
  %s18 = ssub.s32 1, %s16
  %s19 = scalar_select 0, %s18, %s16
  $region1: #{tpu_custom_call.1} parent=0
    #allocation2 [shape = 'u8[65536]{0}', space=vmem, size = 0x10000, scoped, tag = 'output window, operand 0, single buffered']
    #allocation3 [shape = 's32[1]{0}', space=sflag, size = 0x4, scoped, tag = 'scoped memory for tpu_custom_call.1']
    %20 = vsyncpa [#allocation3], 0
    // Predicated region
    $region2: #{tpu_custom_call.1} parent=1 // pred_check
      _
    $region3: #{tpu_custom_call.1} parent=1 // pred_check_branch
      %22 = sbr.rel (0) target = $region5
    $region4: #{tpu_custom_call.1} parent=1 // pred_region
      _
    $region5: #{tpu_custom_call.1} parent=1 // pred_fallthru
      _
    // Predicated region
    $region6: #{tpu_custom_call.1} parent=1 // pred_check
      _
    $region7: #{tpu_custom_call.1} parent=1 // pred_check_branch
      %24 = sbr.rel (0) target = $region9
    $region8: #{tpu_custom_call.1} parent=1 // pred_region
      _
    $region9: #{tpu_custom_call.1} parent=1 // pred_fallthru
      _
    // Predicated region
    $region10: #{tpu_custom_call.1} parent=1 // pred_check
      _
    $region11: #{tpu_custom_call.1} parent=1 // pred_check_branch
      %26 = sbr.rel (0) target = $region13
    $region12: #{tpu_custom_call.1} parent=1 // pred_region
      _
    $region13: #{tpu_custom_call.1} parent=1 // pred_fallthru
      _
    // Predicated region
    $region14: #{tpu_custom_call.1} parent=1 // pred_check
      _
    $region15: #{tpu_custom_call.1} parent=1 // pred_check_branch
      %28 = sbr.rel (0) target = $region17
    $region16: #{tpu_custom_call.1} parent=1 // pred_region
      _
    $region17: #{tpu_custom_call.1} parent=1 // pred_fallthru
      _
    // Predicated region
    $region18: #{tpu_custom_call.1} parent=1 // pred_check
      _
    $region19: #{tpu_custom_call.1} parent=1 // pred_check_branch
      %30 = sbr.rel (0) target = $region21
    $region20: #{tpu_custom_call.1} parent=1 // pred_region
      _
    $region21: #{tpu_custom_call.1} parent=1 // pred_fallthru
      _
    // Predicated region
    $region22: #{tpu_custom_call.1} parent=1 // pred_check
      _
    $region23: #{tpu_custom_call.1} parent=1 // pred_check_branch
      %32 = sbr.rel (0) target = $region25
    $region24: #{tpu_custom_call.1} parent=1 // pred_region
      _
    $region25: #{tpu_custom_call.1} parent=1 // pred_fallthru
      _
    // Predicated region
    $region26: #{tpu_custom_call.1} parent=1 // pred_check
      _
    $region27: #{tpu_custom_call.1} parent=1 // pred_check_branch
      %34 = sbr.rel (0) target = $region29
    $region28: #{tpu_custom_call.1} parent=1 // pred_region
      _
    $region29: #{tpu_custom_call.1} parent=1 // pred_fallthru
      _
    // Predicated region
    $region30: #{tpu_custom_call.1} parent=1 // pred_check
      _
    $region31: #{tpu_custom_call.1} parent=1 // pred_check_branch
      %36 = sbr.rel (0) target = $region33
    $region32: #{tpu_custom_call.1} parent=1 // pred_region
      _
    $region33: #{tpu_custom_call.1} parent=1 // pred_fallthru
      _
    // Predicated region
    $region34: #{tpu_custom_call.1} parent=1 // pred_check
      _
    $region35: #{tpu_custom_call.1} parent=1 // pred_check_branch
      %38 = sbr.rel (0) target = $region37
    $region36: #{tpu_custom_call.1} parent=1 // pred_region
      _
    $region37: #{tpu_custom_call.1} parent=1 // pred_fallthru
      _
    // Predicated region
    $region38: #{tpu_custom_call.1} parent=1 // pred_check
      _
    $region39: #{tpu_custom_call.1} parent=1 // pred_check_branch
      %40 = sbr.rel (0) target = $region41
    $region40: #{tpu_custom_call.1} parent=1 // pred_region
      _
    $region41: #{tpu_custom_call.1} parent=1 // pred_fallthru
      _
    // Predicated region
    $region42: #{tpu_custom_call.1} parent=1 // pred_check
      _
    $region43: #{tpu_custom_call.1} parent=1 // pred_check_branch
      %42 = sbr.rel (0) target = $region45
    $region44: #{tpu_custom_call.1} parent=1 // pred_region
      _
    $region45: #{tpu_custom_call.1} parent=1 // pred_fallthru
      _
    // Predicated region
    $region46: #{tpu_custom_call.1} parent=1 // pred_check
      _
    $region47: #{tpu_custom_call.1} parent=1 // pred_check_branch
      %44 = sbr.rel (0) target = $region49
    $region48: #{tpu_custom_call.1} parent=1 // pred_region
      _
    $region49: #{tpu_custom_call.1} parent=1 // pred_fallthru
      _
    // Predicated region
    $region50: #{tpu_custom_call.1} parent=1 // pred_check
      _
    $region51: #{tpu_custom_call.1} parent=1 // pred_check_branch
      %46 = sbr.rel (0) target = $region53
    $region52: #{tpu_custom_call.1} parent=1 // pred_region
      _
    $region53: #{tpu_custom_call.1} parent=1 // pred_fallthru
      _
    // Predicated region
    $region54: #{tpu_custom_call.1} parent=1 // pred_check
      _
    $region55: #{tpu_custom_call.1} parent=1 // pred_check_branch
      %48 = sbr.rel (0) target = $region57
    $region56: #{tpu_custom_call.1} parent=1 // pred_region
      _
    $region57: #{tpu_custom_call.1} parent=1 // pred_fallthru
      _
    // Predicated region
    $region58: #{tpu_custom_call.1} parent=1 // pred_check
      _
    $region59: #{tpu_custom_call.1} parent=1 // pred_check_branch
      %50 = sbr.rel (0) target = $region61
    $region60: #{tpu_custom_call.1} parent=1 // pred_region
      _
    $region61: #{tpu_custom_call.1} parent=1 // pred_fallthru
      _
    %v52 = vld [vmem:[%s0] sm:$0xff]
    %v53 = vld [vmem:[%s0 + $0x8] sm:$0xff]
    %v54 = vld [vmem:[%s0 + $0x10] sm:$0xff]
    %v55 = vld [vmem:[%s0 + $0x18] sm:$0xff]
    %v56 = vld [vmem:[%s0 + $0x20] sm:$0xff]
    %v57 = vld [vmem:[%s0 + $0x28] sm:$0xff]
    %v58 = vld [vmem:[%s0 + $0x30] sm:$0xff]
    %v59 = vld [vmem:[%s0 + $0x38] sm:$0xff]
    %v60 = vpack.c.bf16 %v56, %v52
    %v61 = vpack.c.bf16 %v57, %v53
    %v62 = vpack.c.bf16 %v58, %v54
    %v63 = vpack.c.bf16 %v59, %v55
    %v64 = vld [vmem:[%s1] sm:$0xf]
    %v65 = vld [vmem:[%s1 + $0x4] sm:$0xf]
    %v66 = vld [vmem:[%s1 + $0x8] sm:$0xf]
    %v67 = vld [vmem:[%s1 + $0xc] sm:$0xf]
    %v68 = vld [vmem:[%s2] sm:$0xff]
    %v69 = vld [vmem:[%s2 + $0x8] sm:$0xff]
    %v70 = vld [vmem:[%s2 + $0x10] sm:$0xff]
    %v71 = vld [vmem:[%s2 + $0x18] sm:$0xff]
    %73 = vset.pattern.permute.xlu0 0
    %74 = vperm.xlu0 %73, %v68
    %v75 = vpop.permute.xlu0 %74
    %78 = vset.pattern.permute.xlu0 0
    %79 = vperm.xlu0 %78, %v69
    %v80 = vpop.permute.xlu0 %79
    %83 = vset.pattern.permute.xlu0 0
    %84 = vperm.xlu0 %83, %v70
    %v85 = vpop.permute.xlu0 %84
    %88 = vset.pattern.permute.xlu0 0
    %89 = vperm.xlu0 %88, %v71
    %v90 = vpop.permute.xlu0 %89
    %v96 = vunpack.c.l.b16 %v64
    %v97 = vunpack.c.l.b16 %v65
    %v98 = vunpack.c.l.b16 %v66
    %v99 = vunpack.c.l.b16 %v67
    %v100 = vpack.c.b16 %v97, %v96
    %v101 = vpack.c.b16 %v99, %v98
    %vm102 = vcmask 130048
    %v104 = vsel %vm102, %v100, 0
    %v107 = vsel %vm102, %v101, 0
    %109 = vmatpush.bf16.msra.mxu0 0
    %110 = vmatpush.bf16.msra.mxu0 0
    %111 = vmatpush.bf16.msra.mxu0 0
    %112 = vmatpush.bf16.msra.mxu0 0
    %113 = vmatpush.bf16.msra.mxu0 0
    %114 = vmatpush.bf16.msra.mxu0 0
    %115 = vmatpush.bf16.msra.mxu0 0
    %116 = vmatpush.bf16.msra.mxu0 %v60
    %117 = vmatmul.bf16.gmra.mxu0 %v104
    %v118 = vpop.f32.mrf.mxu0
    %v119 = vadd.f32 %v75, %v118
    %v120 = vpop.f32.mrf.mxu0
    %v121 = vadd.f32 %v80, %v120
    %122 = vmatmul.bf16.gmra.mxu0 %v107
    %v123 = vpop.f32.mrf.mxu0
    %v124 = vadd.f32 %v85, %v123
    %v125 = vpop.f32.mrf.mxu0
    %v126 = vadd.f32 %v90, %v125
    %127 = vdwg.mxu0
    %128 = vmatpush.bf16.msra.mxu0 0
    %129 = vmatpush.bf16.msra.mxu0 0
    %130 = vmatpush.bf16.msra.mxu0 0
    %131 = vmatpush.bf16.msra.mxu0 0
    %132 = vmatpush.bf16.msra.mxu0 0
    %133 = vmatpush.bf16.msra.mxu0 0
    %134 = vmatpush.bf16.msra.mxu0 0
    %135 = vmatpush.bf16.msra.mxu0 %v61
    %136 = vmatmul.bf16.gmra.mxu0 %v104
    %v137 = vpop.f32.mrf.mxu0
    %v138 = vadd.f32 %v75, %v137
    %v139 = vpop.f32.mrf.mxu0
    %v140 = vadd.f32 %v80, %v139
    %141 = vmatmul.bf16.gmra.mxu0 %v107
    %v142 = vpop.f32.mrf.mxu0
    %v143 = vadd.f32 %v85, %v142
    %v144 = vpop.f32.mrf.mxu0
    %v145 = vadd.f32 %v90, %v144
    %146 = vdwg.mxu0
    %147 = vmatpush.bf16.msra.mxu0 0
    %148 = vmatpush.bf16.msra.mxu0 0
    %149 = vmatpush.bf16.msra.mxu0 0
    %150 = vmatpush.bf16.msra.mxu0 0
    %151 = vmatpush.bf16.msra.mxu0 0
    %152 = vmatpush.bf16.msra.mxu0 0
    %153 = vmatpush.bf16.msra.mxu0 0
    %154 = vmatpush.bf16.msra.mxu0 %v62
    %155 = vmatmul.bf16.gmra.mxu0 %v104
    %v156 = vpop.f32.mrf.mxu0
    %v157 = vadd.f32 %v75, %v156
    %v158 = vpop.f32.mrf.mxu0
    %v159 = vadd.f32 %v80, %v158
    %160 = vmatmul.bf16.gmra.mxu0 %v107
    %v161 = vpop.f32.mrf.mxu0
    %v162 = vadd.f32 %v85, %v161
    %v163 = vpop.f32.mrf.mxu0
    %v164 = vadd.f32 %v90, %v163
    %165 = vdwg.mxu0
    %166 = vmatpush.bf16.msra.mxu0 0
    %167 = vmatpush.bf16.msra.mxu0 0
    %168 = vmatpush.bf16.msra.mxu0 0
    %169 = vmatpush.bf16.msra.mxu0 0
    %170 = vmatpush.bf16.msra.mxu0 0
    %171 = vmatpush.bf16.msra.mxu0 0
    %172 = vmatpush.bf16.msra.mxu0 0
    %173 = vmatpush.bf16.msra.mxu0 %v63
    %174 = vmatmul.bf16.gmra.mxu0 %v104
    %v175 = vpop.f32.mrf.mxu0
    %v176 = vadd.f32 %v75, %v175
    %v177 = vpop.f32.mrf.mxu0
    %v178 = vadd.f32 %v80, %v177
    %179 = vmatmul.bf16.gmra.mxu0 %v107
    %v180 = vpop.f32.mrf.mxu0
    %v181 = vadd.f32 %v85, %v180
    %v182 = vpop.f32.mrf.mxu0
    %v183 = vadd.f32 %v90, %v182
    %184 = vdwg.mxu0
    %v185 = vmax.f32 %v119, 0.0
    %v186 = vmax.f32 %v138, 0.0
    %v187 = vmax.f32 %v157, 0.0
    %v188 = vmax.f32 %v176, 0.0
    %v189 = vmax.f32 %v121, 0.0
    %v190 = vmax.f32 %v140, 0.0
    %v191 = vmax.f32 %v159, 0.0
    %v192 = vmax.f32 %v178, 0.0
    %v193 = vmax.f32 %v124, 0.0
    %v194 = vmax.f32 %v143, 0.0
    %v195 = vmax.f32 %v162, 0.0
    %v196 = vmax.f32 %v181, 0.0
    %v197 = vmax.f32 %v126, 0.0
    %v198 = vmax.f32 %v145, 0.0
    %v199 = vmax.f32 %v164, 0.0
    %v200 = vmax.f32 %v183, 0.0
    %v201 = vand.u32 2147483647, %v119
    %v202 = vand.u32 2147483647, %v138
    %v203 = vand.u32 2147483647, %v157
    %v204 = vand.u32 2147483647, %v176
    %v205 = vand.u32 2147483647, %v121
    %v206 = vand.u32 2147483647, %v140
    %v207 = vand.u32 2147483647, %v159
    %v208 = vand.u32 2147483647, %v178
    %v209 = vand.u32 2147483647, %v124
    %v210 = vand.u32 2147483647, %v143
    %v211 = vand.u32 2147483647, %v162
    %v212 = vand.u32 2147483647, %v181
    %v213 = vand.u32 2147483647, %v126
    %v214 = vand.u32 2147483647, %v145
    %v215 = vand.u32 2147483647, %v164
    %v216 = vand.u32 2147483647, %v183
    %v217 = vsub.f32 0.0, %v201
    %v218 = vsub.f32 0.0, %v202
    %v219 = vsub.f32 0.0, %v203
    %v220 = vsub.f32 0.0, %v204
    %v221 = vsub.f32 0.0, %v205
    %v222 = vsub.f32 0.0, %v206
    %v223 = vsub.f32 0.0, %v207
    %v224 = vsub.f32 0.0, %v208
    %v225 = vsub.f32 0.0, %v209
    %v226 = vsub.f32 0.0, %v210
    %v227 = vsub.f32 0.0, %v211
    %v228 = vsub.f32 0.0, %v212
    %v229 = vsub.f32 0.0, %v213
    %v230 = vsub.f32 0.0, %v214
    %v231 = vsub.f32 0.0, %v215
    %v232 = vsub.f32 0.0, %v216
    %v233 = vmul.f32 %v217, 1.442695
    %v234 = vpow.pop %v233
    %v235 = vmul.f32 %v218, 1.442695
    %v236 = vpow.pop %v235
    %v237 = vmul.f32 %v219, 1.442695
    %v238 = vpow.pop %v237
    %v239 = vmul.f32 %v220, 1.442695
    %v240 = vpow.pop %v239
    %v241 = vmul.f32 %v221, 1.442695
    %v242 = vpow.pop %v241
    %v243 = vmul.f32 %v222, 1.442695
    %v244 = vpow.pop %v243
    %v245 = vmul.f32 %v223, 1.442695
    %v246 = vpow.pop %v245
    %v247 = vmul.f32 %v224, 1.442695
    %v248 = vpow.pop %v247
    %v249 = vmul.f32 %v225, 1.442695
    %v250 = vpow.pop %v249
    %v251 = vmul.f32 %v226, 1.442695
    %v252 = vpow.pop %v251
    %v253 = vmul.f32 %v227, 1.442695
    %v254 = vpow.pop %v253
    %v255 = vmul.f32 %v228, 1.442695
    %v256 = vpow.pop %v255
    %v257 = vmul.f32 %v229, 1.442695
    %v258 = vpow.pop %v257
    %v259 = vmul.f32 %v230, 1.442695
    %v260 = vpow.pop %v259
    %v261 = vmul.f32 %v231, 1.442695
    %v262 = vpow.pop %v261
    %v263 = vmul.f32 %v232, 1.442695
    %v264 = vpow.pop %v263
    %v265 = vadd.f32 %v234, 1.0
    %v266 = vlog2.pop %v265
    %v267 = vmul.f32 %v266, 0.6931472
    %v268 = vmul.f32 -0.5, %v234
    %v269 = vadd.f32 %v268, 1.0
    %v270 = vmul.f32 %v269, %v234
    %v271 = vand.u32 2147483647, %v234
    %vm272 = vcmp.lt.f32.partialorder %v271, 0.0004427343
    %v273 = vsel %vm272, %v270, %v267
    %v274 = vadd.f32 %v236, 1.0
    %v275 = vlog2.pop %v274
    %v276 = vmul.f32 %v275, 0.6931472
    %v277 = vmul.f32 -0.5, %v236
    %v278 = vadd.f32 %v277, 1.0
    %v279 = vmul.f32 %v278, %v236
    %v280 = vand.u32 2147483647, %v236
    %vm281 = vcmp.lt.f32.partialorder %v280, 0.0004427343
    %v282 = vsel %vm281, %v279, %v276
    %v283 = vadd.f32 %v238, 1.0
    %v284 = vlog2.pop %v283
    %v285 = vmul.f32 %v284, 0.6931472
    %v286 = vmul.f32 -0.5, %v238
    %v287 = vadd.f32 %v286, 1.0
    %v288 = vmul.f32 %v287, %v238
    %v289 = vand.u32 2147483647, %v238
    %vm290 = vcmp.lt.f32.partialorder %v289, 0.0004427343
    %v291 = vsel %vm290, %v288, %v285
    %v292 = vadd.f32 %v240, 1.0
    %v293 = vlog2.pop %v292
    %v294 = vmul.f32 %v293, 0.6931472
    %v295 = vmul.f32 -0.5, %v240
    %v296 = vadd.f32 %v295, 1.0
    %v297 = vmul.f32 %v296, %v240
    %v298 = vand.u32 2147483647, %v240
    %vm299 = vcmp.lt.f32.partialorder %v298, 0.0004427343
    %v300 = vsel %vm299, %v297, %v294
    %v301 = vadd.f32 %v242, 1.0
    %v302 = vlog2.pop %v301
    %v303 = vmul.f32 %v302, 0.6931472
    %v304 = vmul.f32 -0.5, %v242
    %v305 = vadd.f32 %v304, 1.0
    %v306 = vmul.f32 %v305, %v242
    %v307 = vand.u32 2147483647, %v242
    %vm308 = vcmp.lt.f32.partialorder %v307, 0.0004427343
    %v309 = vsel %vm308, %v306, %v303
    %v310 = vadd.f32 %v244, 1.0
    %v311 = vlog2.pop %v310
    %v312 = vmul.f32 %v311, 0.6931472
    %v313 = vmul.f32 -0.5, %v244
    %v314 = vadd.f32 %v313, 1.0
    %v315 = vmul.f32 %v314, %v244
    %v316 = vand.u32 2147483647, %v244
    %vm317 = vcmp.lt.f32.partialorder %v316, 0.0004427343
    %v318 = vsel %vm317, %v315, %v312
    %v319 = vadd.f32 %v246, 1.0
    %v320 = vlog2.pop %v319
    %v321 = vmul.f32 %v320, 0.6931472
    %v322 = vmul.f32 -0.5, %v246
    %v323 = vadd.f32 %v322, 1.0
    %v324 = vmul.f32 %v323, %v246
    %v325 = vand.u32 2147483647, %v246
    %vm326 = vcmp.lt.f32.partialorder %v325, 0.0004427343
    %v327 = vsel %vm326, %v324, %v321
    %v328 = vadd.f32 %v248, 1.0
    %v329 = vlog2.pop %v328
    %v330 = vmul.f32 %v329, 0.6931472
    %v331 = vmul.f32 -0.5, %v248
    %v332 = vadd.f32 %v331, 1.0
    %v333 = vmul.f32 %v332, %v248
    %v334 = vand.u32 2147483647, %v248
    %vm335 = vcmp.lt.f32.partialorder %v334, 0.0004427343
    %v336 = vsel %vm335, %v333, %v330
    %v337 = vadd.f32 %v250, 1.0
    %v338 = vlog2.pop %v337
    %v339 = vmul.f32 %v338, 0.6931472
    %v340 = vmul.f32 -0.5, %v250
    %v341 = vadd.f32 %v340, 1.0
    %v342 = vmul.f32 %v341, %v250
    %v343 = vand.u32 2147483647, %v250
    %vm344 = vcmp.lt.f32.partialorder %v343, 0.0004427343
    %v345 = vsel %vm344, %v342, %v339
    %v346 = vadd.f32 %v252, 1.0
    %v347 = vlog2.pop %v346
    %v348 = vmul.f32 %v347, 0.6931472
    %v349 = vmul.f32 -0.5, %v252
    %v350 = vadd.f32 %v349, 1.0
    %v351 = vmul.f32 %v350, %v252
    %v352 = vand.u32 2147483647, %v252
    %vm353 = vcmp.lt.f32.partialorder %v352, 0.0004427343
    %v354 = vsel %vm353, %v351, %v348
    %v355 = vadd.f32 %v254, 1.0
    %v356 = vlog2.pop %v355
    %v357 = vmul.f32 %v356, 0.6931472
    %v358 = vmul.f32 -0.5, %v254
    %v359 = vadd.f32 %v358, 1.0
    %v360 = vmul.f32 %v359, %v254
    %v361 = vand.u32 2147483647, %v254
    %vm362 = vcmp.lt.f32.partialorder %v361, 0.0004427343
    %v363 = vsel %vm362, %v360, %v357
    %v364 = vadd.f32 %v256, 1.0
    %v365 = vlog2.pop %v364
    %v366 = vmul.f32 %v365, 0.6931472
    %v367 = vmul.f32 -0.5, %v256
    %v368 = vadd.f32 %v367, 1.0
    %v369 = vmul.f32 %v368, %v256
    %v370 = vand.u32 2147483647, %v256
    %vm371 = vcmp.lt.f32.partialorder %v370, 0.0004427343
    %v372 = vsel %vm371, %v369, %v366
    %v373 = vadd.f32 %v258, 1.0
    %v374 = vlog2.pop %v373
    %v375 = vmul.f32 %v374, 0.6931472
    %v376 = vmul.f32 -0.5, %v258
    %v377 = vadd.f32 %v376, 1.0
    %v378 = vmul.f32 %v377, %v258
    %v379 = vand.u32 2147483647, %v258
    %vm380 = vcmp.lt.f32.partialorder %v379, 0.0004427343
    %v381 = vsel %vm380, %v378, %v375
    %v382 = vadd.f32 %v260, 1.0
    %v383 = vlog2.pop %v382
    %v384 = vmul.f32 %v383, 0.6931472
    %v385 = vmul.f32 -0.5, %v260
    %v386 = vadd.f32 %v385, 1.0
    %v387 = vmul.f32 %v386, %v260
    %v388 = vand.u32 2147483647, %v260
    %vm389 = vcmp.lt.f32.partialorder %v388, 0.0004427343
    %v390 = vsel %vm389, %v387, %v384
    %v391 = vadd.f32 %v262, 1.0
    %v392 = vlog2.pop %v391
    %v393 = vmul.f32 %v392, 0.6931472
    %v394 = vmul.f32 -0.5, %v262
    %v395 = vadd.f32 %v394, 1.0
    %v396 = vmul.f32 %v395, %v262
    %v397 = vand.u32 2147483647, %v262
    %vm398 = vcmp.lt.f32.partialorder %v397, 0.0004427343
    %v399 = vsel %vm398, %v396, %v393
    %v400 = vadd.f32 %v264, 1.0
    %v401 = vlog2.pop %v400
    %v402 = vmul.f32 %v401, 0.6931472
    %v403 = vmul.f32 -0.5, %v264
    %v404 = vadd.f32 %v403, 1.0
    %v405 = vmul.f32 %v404, %v264
    %v406 = vand.u32 2147483647, %v264
    %vm407 = vcmp.lt.f32.partialorder %v406, 0.0004427343
    %v408 = vsel %vm407, %v405, %v402
    %v409 = vadd.f32 %v185, %v273
    %v410 = vadd.f32 %v186, %v282
    %v411 = vadd.f32 %v187, %v291
    %v412 = vadd.f32 %v188, %v300
    %v413 = vadd.f32 %v189, %v309
    %v414 = vadd.f32 %v190, %v318
    %v415 = vadd.f32 %v191, %v327
    %v416 = vadd.f32 %v192, %v336
    %v417 = vadd.f32 %v193, %v345
    %v418 = vadd.f32 %v194, %v354
    %v419 = vadd.f32 %v195, %v363
    %v420 = vadd.f32 %v196, %v372
    %v421 = vadd.f32 %v197, %v381
    %v422 = vadd.f32 %v198, %v390
    %v423 = vadd.f32 %v199, %v399
    %v424 = vadd.f32 %v200, %v408
    %v425 = vld [vmem:[%s3] sm:$0xf]
    %v426 = vld [vmem:[%s3 + $0x4] sm:$0xf]
    %v427 = vld [vmem:[%s3 + $0x8] sm:$0xf]
    %v428 = vld [vmem:[%s3 + $0xc] sm:$0xf]
    %v429 = vpack.c.bf16 %v413, %v409
    %v430 = vpack.c.bf16 %v414, %v410
    %v431 = vpack.c.bf16 %v415, %v411
    %v432 = vpack.c.bf16 %v416, %v412
    %v433 = vpack.c.bf16 %v421, %v417
    %v434 = vpack.c.bf16 %v422, %v418
    %v435 = vpack.c.bf16 %v423, %v419
    %v436 = vpack.c.bf16 %v424, %v420
    %v437 = vld [vmem:[%s4] sm:$0xff]
    %v438 = vld [vmem:[%s4 + $0x8] sm:$0xff]
    %v439 = vld [vmem:[%s4 + $0x10] sm:$0xff]
    %v440 = vld [vmem:[%s4 + $0x18] sm:$0xff]
    %442 = vset.pattern.permute.xlu0 0
    %443 = vperm.xlu0 %442, %v437
    %v444 = vpop.permute.xlu0 %443
    %447 = vset.pattern.permute.xlu0 0
    %448 = vperm.xlu0 %447, %v438
    %v449 = vpop.permute.xlu0 %448
    %452 = vset.pattern.permute.xlu0 0
    %453 = vperm.xlu0 %452, %v439
    %v454 = vpop.permute.xlu0 %453
    %457 = vset.pattern.permute.xlu0 0
    %458 = vperm.xlu0 %457, %v440
    %v459 = vpop.permute.xlu0 %458
    %v465 = vunpack.c.l.b16 %v425
    %v466 = vunpack.c.l.b16 %v426
    %v467 = vunpack.c.l.b16 %v427
    %v468 = vunpack.c.l.b16 %v428
    %v469 = vpack.c.b16 %v466, %v465
    %v470 = vpack.c.b16 %v468, %v467
    %vm471 = vcmask 261120
    %v473 = vsel %vm471, %v469, 0
    %v476 = vsel %vm471, %v470, 0
    %478 = vmatpush.bf16.msra.mxu0 0
    %479 = vmatpush.bf16.msra.mxu0 0
    %480 = vmatpush.bf16.msra.mxu0 0
    %481 = vmatpush.bf16.msra.mxu0 0
    %482 = vmatpush.bf16.msra.mxu0 0
    %483 = vmatpush.bf16.msra.mxu0 0
    %484 = vmatpush.bf16.msra.mxu0 %v433
    %485 = vmatpush.bf16.msra.mxu0 %v429
    %486 = vmatmul.bf16.gmra.mxu0 %v473
    %v487 = vpop.f32.mrf.mxu0
    %v488 = vadd.f32 %v444, %v487
    %v489 = vpop.f32.mrf.mxu0
    %v490 = vadd.f32 %v449, %v489
    %491 = vmatmul.bf16.gmra.mxu0 %v476
    %v492 = vpop.f32.mrf.mxu0
    %v493 = vadd.f32 %v454, %v492
    %v494 = vpop.f32.mrf.mxu0
    %v495 = vadd.f32 %v459, %v494
    %496 = vdwg.mxu0
    %497 = vmatpush.bf16.msra.mxu0 0
    %498 = vmatpush.bf16.msra.mxu0 0
    %499 = vmatpush.bf16.msra.mxu0 0
    %500 = vmatpush.bf16.msra.mxu0 0
    %501 = vmatpush.bf16.msra.mxu0 0
    %502 = vmatpush.bf16.msra.mxu0 0
    %503 = vmatpush.bf16.msra.mxu0 %v434
    %504 = vmatpush.bf16.msra.mxu0 %v430
    %505 = vmatmul.bf16.gmra.mxu0 %v473
    %v506 = vpop.f32.mrf.mxu0
    %v507 = vadd.f32 %v444, %v506
    %v508 = vpop.f32.mrf.mxu0
    %v509 = vadd.f32 %v449, %v508
    %510 = vmatmul.bf16.gmra.mxu0 %v476
    %v511 = vpop.f32.mrf.mxu0
    %v512 = vadd.f32 %v454, %v511
    %v513 = vpop.f32.mrf.mxu0
    %v514 = vadd.f32 %v459, %v513
    %515 = vdwg.mxu0
    %516 = vmatpush.bf16.msra.mxu0 0
    %517 = vmatpush.bf16.msra.mxu0 0
    %518 = vmatpush.bf16.msra.mxu0 0
    %519 = vmatpush.bf16.msra.mxu0 0
    %520 = vmatpush.bf16.msra.mxu0 0
    %521 = vmatpush.bf16.msra.mxu0 0
    %522 = vmatpush.bf16.msra.mxu0 %v435
    %523 = vmatpush.bf16.msra.mxu0 %v431
    %524 = vmatmul.bf16.gmra.mxu0 %v473
    %v525 = vpop.f32.mrf.mxu0
    %v526 = vadd.f32 %v444, %v525
    %v527 = vpop.f32.mrf.mxu0
    %v528 = vadd.f32 %v449, %v527
    %529 = vmatmul.bf16.gmra.mxu0 %v476
    %v530 = vpop.f32.mrf.mxu0
    %v531 = vadd.f32 %v454, %v530
    %v532 = vpop.f32.mrf.mxu0
    %v533 = vadd.f32 %v459, %v532
    %534 = vdwg.mxu0
    %535 = vmatpush.bf16.msra.mxu0 0
    %536 = vmatpush.bf16.msra.mxu0 0
    %537 = vmatpush.bf16.msra.mxu0 0
    %538 = vmatpush.bf16.msra.mxu0 0
    %539 = vmatpush.bf16.msra.mxu0 0
    %540 = vmatpush.bf16.msra.mxu0 0
    %541 = vmatpush.bf16.msra.mxu0 %v436
    %542 = vmatpush.bf16.msra.mxu0 %v432
    %543 = vmatmul.bf16.gmra.mxu0 %v473
    %v544 = vpop.f32.mrf.mxu0
    %v545 = vadd.f32 %v444, %v544
    %v546 = vpop.f32.mrf.mxu0
    %v547 = vadd.f32 %v449, %v546
    %548 = vmatmul.bf16.gmra.mxu0 %v476
    %v549 = vpop.f32.mrf.mxu0
    %v550 = vadd.f32 %v454, %v549
    %v551 = vpop.f32.mrf.mxu0
    %v552 = vadd.f32 %v459, %v551
    %553 = vdwg.mxu0
    %v554 = vmax.f32 %v488, 0.0
    %v555 = vmax.f32 %v507, 0.0
    %v556 = vmax.f32 %v526, 0.0
    %v557 = vmax.f32 %v545, 0.0
    %v558 = vmax.f32 %v490, 0.0
    %v559 = vmax.f32 %v509, 0.0
    %v560 = vmax.f32 %v528, 0.0
    %v561 = vmax.f32 %v547, 0.0
    %v562 = vmax.f32 %v493, 0.0
    %v563 = vmax.f32 %v512, 0.0
    %v564 = vmax.f32 %v531, 0.0
    %v565 = vmax.f32 %v550, 0.0
    %v566 = vmax.f32 %v495, 0.0
    %v567 = vmax.f32 %v514, 0.0
    %v568 = vmax.f32 %v533, 0.0
    %v569 = vmax.f32 %v552, 0.0
    %v570 = vand.u32 2147483647, %v488
    %v571 = vand.u32 2147483647, %v507
    %v572 = vand.u32 2147483647, %v526
    %v573 = vand.u32 2147483647, %v545
    %v574 = vand.u32 2147483647, %v490
    %v575 = vand.u32 2147483647, %v509
    %v576 = vand.u32 2147483647, %v528
    %v577 = vand.u32 2147483647, %v547
    %v578 = vand.u32 2147483647, %v493
    %v579 = vand.u32 2147483647, %v512
    %v580 = vand.u32 2147483647, %v531
    %v581 = vand.u32 2147483647, %v550
    %v582 = vand.u32 2147483647, %v495
    %v583 = vand.u32 2147483647, %v514
    %v584 = vand.u32 2147483647, %v533
    %v585 = vand.u32 2147483647, %v552
    %v586 = vsub.f32 0.0, %v570
    %v587 = vsub.f32 0.0, %v571
    %v588 = vsub.f32 0.0, %v572
    %v589 = vsub.f32 0.0, %v573
    %v590 = vsub.f32 0.0, %v574
    %v591 = vsub.f32 0.0, %v575
    %v592 = vsub.f32 0.0, %v576
    %v593 = vsub.f32 0.0, %v577
    %v594 = vsub.f32 0.0, %v578
    %v595 = vsub.f32 0.0, %v579
    %v596 = vsub.f32 0.0, %v580
    %v597 = vsub.f32 0.0, %v581
    %v598 = vsub.f32 0.0, %v582
    %v599 = vsub.f32 0.0, %v583
    %v600 = vsub.f32 0.0, %v584
    %v601 = vsub.f32 0.0, %v585
    %v602 = vmul.f32 %v586, 1.442695
    %v603 = vpow.pop %v602
    %v604 = vmul.f32 %v587, 1.442695
    %v605 = vpow.pop %v604
    %v606 = vmul.f32 %v588, 1.442695
    %v607 = vpow.pop %v606
    %v608 = vmul.f32 %v589, 1.442695
    %v609 = vpow.pop %v608
    %v610 = vmul.f32 %v590, 1.442695
    %v611 = vpow.pop %v610
    %v612 = vmul.f32 %v591, 1.442695
    %v613 = vpow.pop %v612
    %v614 = vmul.f32 %v592, 1.442695
    %v615 = vpow.pop %v614
    %v616 = vmul.f32 %v593, 1.442695
    %v617 = vpow.pop %v616
    %v618 = vmul.f32 %v594, 1.442695
    %v619 = vpow.pop %v618
    %v620 = vmul.f32 %v595, 1.442695
    %v621 = vpow.pop %v620
    %v622 = vmul.f32 %v596, 1.442695
    %v623 = vpow.pop %v622
    %v624 = vmul.f32 %v597, 1.442695
    %v625 = vpow.pop %v624
    %v626 = vmul.f32 %v598, 1.442695
    %v627 = vpow.pop %v626
    %v628 = vmul.f32 %v599, 1.442695
    %v629 = vpow.pop %v628
    %v630 = vmul.f32 %v600, 1.442695
    %v631 = vpow.pop %v630
    %v632 = vmul.f32 %v601, 1.442695
    %v633 = vpow.pop %v632
    %v634 = vadd.f32 %v603, 1.0
    %v635 = vlog2.pop %v634
    %v636 = vmul.f32 %v635, 0.6931472
    %v637 = vmul.f32 -0.5, %v603
    %v638 = vadd.f32 %v637, 1.0
    %v639 = vmul.f32 %v638, %v603
    %v640 = vand.u32 2147483647, %v603
    %vm641 = vcmp.lt.f32.partialorder %v640, 0.0004427343
    %v642 = vsel %vm641, %v639, %v636
    %v643 = vadd.f32 %v605, 1.0
    %v644 = vlog2.pop %v643
    %v645 = vmul.f32 %v644, 0.6931472
    %v646 = vmul.f32 -0.5, %v605
    %v647 = vadd.f32 %v646, 1.0
    %v648 = vmul.f32 %v647, %v605
    %v649 = vand.u32 2147483647, %v605
    %vm650 = vcmp.lt.f32.partialorder %v649, 0.0004427343
    %v651 = vsel %vm650, %v648, %v645
    %v652 = vadd.f32 %v607, 1.0
    %v653 = vlog2.pop %v652
    %v654 = vmul.f32 %v653, 0.6931472
    %v655 = vmul.f32 -0.5, %v607
    %v656 = vadd.f32 %v655, 1.0
    %v657 = vmul.f32 %v656, %v607
    %v658 = vand.u32 2147483647, %v607
    %vm659 = vcmp.lt.f32.partialorder %v658, 0.0004427343
    %v660 = vsel %vm659, %v657, %v654
    %v661 = vadd.f32 %v609, 1.0
    %v662 = vlog2.pop %v661
    %v663 = vmul.f32 %v662, 0.6931472
    %v664 = vmul.f32 -0.5, %v609
    %v665 = vadd.f32 %v664, 1.0
    %v666 = vmul.f32 %v665, %v609
    %v667 = vand.u32 2147483647, %v609
    %vm668 = vcmp.lt.f32.partialorder %v667, 0.0004427343
    %v669 = vsel %vm668, %v666, %v663
    %v670 = vadd.f32 %v611, 1.0
    %v671 = vlog2.pop %v670
    %v672 = vmul.f32 %v671, 0.6931472
    %v673 = vmul.f32 -0.5, %v611
    %v674 = vadd.f32 %v673, 1.0
    %v675 = vmul.f32 %v674, %v611
    %v676 = vand.u32 2147483647, %v611
    %vm677 = vcmp.lt.f32.partialorder %v676, 0.0004427343
    %v678 = vsel %vm677, %v675, %v672
    %v679 = vadd.f32 %v613, 1.0
    %v680 = vlog2.pop %v679
    %v681 = vmul.f32 %v680, 0.6931472
    %v682 = vmul.f32 -0.5, %v613
    %v683 = vadd.f32 %v682, 1.0
    %v684 = vmul.f32 %v683, %v613
    %v685 = vand.u32 2147483647, %v613
    %vm686 = vcmp.lt.f32.partialorder %v685, 0.0004427343
    %v687 = vsel %vm686, %v684, %v681
    %v688 = vadd.f32 %v615, 1.0
    %v689 = vlog2.pop %v688
    %v690 = vmul.f32 %v689, 0.6931472
    %v691 = vmul.f32 -0.5, %v615
    %v692 = vadd.f32 %v691, 1.0
    %v693 = vmul.f32 %v692, %v615
    %v694 = vand.u32 2147483647, %v615
    %vm695 = vcmp.lt.f32.partialorder %v694, 0.0004427343
    %v696 = vsel %vm695, %v693, %v690
    %v697 = vadd.f32 %v617, 1.0
    %v698 = vlog2.pop %v697
    %v699 = vmul.f32 %v698, 0.6931472
    %v700 = vmul.f32 -0.5, %v617
    %v701 = vadd.f32 %v700, 1.0
    %v702 = vmul.f32 %v701, %v617
    %v703 = vand.u32 2147483647, %v617
    %vm704 = vcmp.lt.f32.partialorder %v703, 0.0004427343
    %v705 = vsel %vm704, %v702, %v699
    %v706 = vadd.f32 %v619, 1.0
    %v707 = vlog2.pop %v706
    %v708 = vmul.f32 %v707, 0.6931472
    %v709 = vmul.f32 -0.5, %v619
    %v710 = vadd.f32 %v709, 1.0
    %v711 = vmul.f32 %v710, %v619
    %v712 = vand.u32 2147483647, %v619
    %vm713 = vcmp.lt.f32.partialorder %v712, 0.0004427343
    %v714 = vsel %vm713, %v711, %v708
    %v715 = vadd.f32 %v621, 1.0
    %v716 = vlog2.pop %v715
    %v717 = vmul.f32 %v716, 0.6931472
    %v718 = vmul.f32 -0.5, %v621
    %v719 = vadd.f32 %v718, 1.0
    %v720 = vmul.f32 %v719, %v621
    %v721 = vand.u32 2147483647, %v621
    %vm722 = vcmp.lt.f32.partialorder %v721, 0.0004427343
    %v723 = vsel %vm722, %v720, %v717
    %v724 = vadd.f32 %v623, 1.0
    %v725 = vlog2.pop %v724
    %v726 = vmul.f32 %v725, 0.6931472
    %v727 = vmul.f32 -0.5, %v623
    %v728 = vadd.f32 %v727, 1.0
    %v729 = vmul.f32 %v728, %v623
    %v730 = vand.u32 2147483647, %v623
    %vm731 = vcmp.lt.f32.partialorder %v730, 0.0004427343
    %v732 = vsel %vm731, %v729, %v726
    %v733 = vadd.f32 %v625, 1.0
    %v734 = vlog2.pop %v733
    %v735 = vmul.f32 %v734, 0.6931472
    %v736 = vmul.f32 -0.5, %v625
    %v737 = vadd.f32 %v736, 1.0
    %v738 = vmul.f32 %v737, %v625
    %v739 = vand.u32 2147483647, %v625
    %vm740 = vcmp.lt.f32.partialorder %v739, 0.0004427343
    %v741 = vsel %vm740, %v738, %v735
    %v742 = vadd.f32 %v627, 1.0
    %v743 = vlog2.pop %v742
    %v744 = vmul.f32 %v743, 0.6931472
    %v745 = vmul.f32 -0.5, %v627
    %v746 = vadd.f32 %v745, 1.0
    %v747 = vmul.f32 %v746, %v627
    %v748 = vand.u32 2147483647, %v627
    %vm749 = vcmp.lt.f32.partialorder %v748, 0.0004427343
    %v750 = vsel %vm749, %v747, %v744
    %v751 = vadd.f32 %v629, 1.0
    %v752 = vlog2.pop %v751
    %v753 = vmul.f32 %v752, 0.6931472
    %v754 = vmul.f32 -0.5, %v629
    %v755 = vadd.f32 %v754, 1.0
    %v756 = vmul.f32 %v755, %v629
    %v757 = vand.u32 2147483647, %v629
    %vm758 = vcmp.lt.f32.partialorder %v757, 0.0004427343
    %v759 = vsel %vm758, %v756, %v753
    %v760 = vadd.f32 %v631, 1.0
    %v761 = vlog2.pop %v760
    %v762 = vmul.f32 %v761, 0.6931472
    %v763 = vmul.f32 -0.5, %v631
    %v764 = vadd.f32 %v763, 1.0
    %v765 = vmul.f32 %v764, %v631
    %v766 = vand.u32 2147483647, %v631
    %vm767 = vcmp.lt.f32.partialorder %v766, 0.0004427343
    %v768 = vsel %vm767, %v765, %v762
    %v769 = vadd.f32 %v633, 1.0
    %v770 = vlog2.pop %v769
    %v771 = vmul.f32 %v770, 0.6931472
    %v772 = vmul.f32 -0.5, %v633
    %v773 = vadd.f32 %v772, 1.0
    %v774 = vmul.f32 %v773, %v633
    %v775 = vand.u32 2147483647, %v633
    %vm776 = vcmp.lt.f32.partialorder %v775, 0.0004427343
    %v777 = vsel %vm776, %v774, %v771
    %v778 = vadd.f32 %v554, %v642
    %v779 = vadd.f32 %v555, %v651
    %v780 = vadd.f32 %v556, %v660
    %v781 = vadd.f32 %v557, %v669
    %v782 = vadd.f32 %v558, %v678
    %v783 = vadd.f32 %v559, %v687
    %v784 = vadd.f32 %v560, %v696
    %v785 = vadd.f32 %v561, %v705
    %v786 = vadd.f32 %v562, %v714
    %v787 = vadd.f32 %v563, %v723
    %v788 = vadd.f32 %v564, %v732
    %v789 = vadd.f32 %v565, %v741
    %v790 = vadd.f32 %v566, %v750
    %v791 = vadd.f32 %v567, %v759
    %v792 = vadd.f32 %v568, %v768
    %v793 = vadd.f32 %v569, %v777
    %v794 = vld [vmem:[%s5] sm:$0xf]
    %v795 = vld [vmem:[%s5 + $0x4] sm:$0xf]
    %v796 = vld [vmem:[%s5 + $0x8] sm:$0xf]
    %v797 = vld [vmem:[%s5 + $0xc] sm:$0xf]
    %v798 = vpack.c.bf16 %v782, %v778
    %v799 = vpack.c.bf16 %v783, %v779
    %v800 = vpack.c.bf16 %v784, %v780
    %v801 = vpack.c.bf16 %v785, %v781
    %v802 = vpack.c.bf16 %v790, %v786
    %v803 = vpack.c.bf16 %v791, %v787
    %v804 = vpack.c.bf16 %v792, %v788
    %v805 = vpack.c.bf16 %v793, %v789
    %v806 = vld [vmem:[%s6] sm:$0xff]
    %v807 = vld [vmem:[%s6 + $0x8] sm:$0xff]
    %v808 = vld [vmem:[%s6 + $0x10] sm:$0xff]
    %v809 = vld [vmem:[%s6 + $0x18] sm:$0xff]
    %811 = vset.pattern.permute.xlu0 0
    %812 = vperm.xlu0 %811, %v806
    %v813 = vpop.permute.xlu0 %812
    %816 = vset.pattern.permute.xlu0 0
    %817 = vperm.xlu0 %816, %v807
    %v818 = vpop.permute.xlu0 %817
    %821 = vset.pattern.permute.xlu0 0
    %822 = vperm.xlu0 %821, %v808
    %v823 = vpop.permute.xlu0 %822
    %826 = vset.pattern.permute.xlu0 0
    %827 = vperm.xlu0 %826, %v809
    %v828 = vpop.permute.xlu0 %827
    %v834 = vunpack.c.l.b16 %v794
    %v835 = vunpack.c.l.b16 %v795
    %v836 = vunpack.c.l.b16 %v796
    %v837 = vunpack.c.l.b16 %v797
    %v838 = vpack.c.b16 %v835, %v834
    %v839 = vpack.c.b16 %v837, %v836
    %v841 = vsel %vm471, %v838, 0
    %v844 = vsel %vm471, %v839, 0
    %846 = vmatpush.bf16.msra.mxu0 0
    %847 = vmatpush.bf16.msra.mxu0 0
    %848 = vmatpush.bf16.msra.mxu0 0
    %849 = vmatpush.bf16.msra.mxu0 0
    %850 = vmatpush.bf16.msra.mxu0 0
    %851 = vmatpush.bf16.msra.mxu0 0
    %852 = vmatpush.bf16.msra.mxu0 %v802
    %853 = vmatpush.bf16.msra.mxu0 %v798
    %854 = vmatmul.bf16.gmra.mxu0 %v841
    %v855 = vpop.f32.mrf.mxu0
    %v856 = vadd.f32 %v813, %v855
    %v857 = vpop.f32.mrf.mxu0
    %v858 = vadd.f32 %v818, %v857
    %859 = vmatmul.bf16.gmra.mxu0 %v844
    %v860 = vpop.f32.mrf.mxu0
    %v861 = vadd.f32 %v823, %v860
    %v862 = vpop.f32.mrf.mxu0
    %v863 = vadd.f32 %v828, %v862
    %864 = vdwg.mxu0
    %865 = vmatpush.bf16.msra.mxu0 0
    %866 = vmatpush.bf16.msra.mxu0 0
    %867 = vmatpush.bf16.msra.mxu0 0
    %868 = vmatpush.bf16.msra.mxu0 0
    %869 = vmatpush.bf16.msra.mxu0 0
    %870 = vmatpush.bf16.msra.mxu0 0
    %871 = vmatpush.bf16.msra.mxu0 %v803
    %872 = vmatpush.bf16.msra.mxu0 %v799
    %873 = vmatmul.bf16.gmra.mxu0 %v841
    %v874 = vpop.f32.mrf.mxu0
    %v875 = vadd.f32 %v813, %v874
    %v876 = vpop.f32.mrf.mxu0
    %v877 = vadd.f32 %v818, %v876
    %878 = vmatmul.bf16.gmra.mxu0 %v844
    %v879 = vpop.f32.mrf.mxu0
    %v880 = vadd.f32 %v823, %v879
    %v881 = vpop.f32.mrf.mxu0
    %v882 = vadd.f32 %v828, %v881
    %883 = vdwg.mxu0
    %884 = vmatpush.bf16.msra.mxu0 0
    %885 = vmatpush.bf16.msra.mxu0 0
    %886 = vmatpush.bf16.msra.mxu0 0
    %887 = vmatpush.bf16.msra.mxu0 0
    %888 = vmatpush.bf16.msra.mxu0 0
    %889 = vmatpush.bf16.msra.mxu0 0
    %890 = vmatpush.bf16.msra.mxu0 %v804
    %891 = vmatpush.bf16.msra.mxu0 %v800
    %892 = vmatmul.bf16.gmra.mxu0 %v841
    %v893 = vpop.f32.mrf.mxu0
    %v894 = vadd.f32 %v813, %v893
    %v895 = vpop.f32.mrf.mxu0
    %v896 = vadd.f32 %v818, %v895
    %897 = vmatmul.bf16.gmra.mxu0 %v844
    %v898 = vpop.f32.mrf.mxu0
    %v899 = vadd.f32 %v823, %v898
    %v900 = vpop.f32.mrf.mxu0
    %v901 = vadd.f32 %v828, %v900
    %902 = vdwg.mxu0
    %903 = vmatpush.bf16.msra.mxu0 0
    %904 = vmatpush.bf16.msra.mxu0 0
    %905 = vmatpush.bf16.msra.mxu0 0
    %906 = vmatpush.bf16.msra.mxu0 0
    %907 = vmatpush.bf16.msra.mxu0 0
    %908 = vmatpush.bf16.msra.mxu0 0
    %909 = vmatpush.bf16.msra.mxu0 %v805
    %910 = vmatpush.bf16.msra.mxu0 %v801
    %911 = vmatmul.bf16.gmra.mxu0 %v841
    %v912 = vpop.f32.mrf.mxu0
    %v913 = vadd.f32 %v813, %v912
    %v914 = vpop.f32.mrf.mxu0
    %v915 = vadd.f32 %v818, %v914
    %916 = vmatmul.bf16.gmra.mxu0 %v844
    %v917 = vpop.f32.mrf.mxu0
    %v918 = vadd.f32 %v823, %v917
    %v919 = vpop.f32.mrf.mxu0
    %v920 = vadd.f32 %v828, %v919
    %921 = vdwg.mxu0
    %v922 = vmax.f32 %v856, 0.0
    %v923 = vmax.f32 %v875, 0.0
    %v924 = vmax.f32 %v894, 0.0
    %v925 = vmax.f32 %v913, 0.0
    %v926 = vmax.f32 %v858, 0.0
    %v927 = vmax.f32 %v877, 0.0
    %v928 = vmax.f32 %v896, 0.0
    %v929 = vmax.f32 %v915, 0.0
    %v930 = vmax.f32 %v861, 0.0
    %v931 = vmax.f32 %v880, 0.0
    %v932 = vmax.f32 %v899, 0.0
    %v933 = vmax.f32 %v918, 0.0
    %v934 = vmax.f32 %v863, 0.0
    %v935 = vmax.f32 %v882, 0.0
    %v936 = vmax.f32 %v901, 0.0
    %v937 = vmax.f32 %v920, 0.0
    %v938 = vand.u32 2147483647, %v856
    %v939 = vand.u32 2147483647, %v875
    %v940 = vand.u32 2147483647, %v894
    %v941 = vand.u32 2147483647, %v913
    %v942 = vand.u32 2147483647, %v858
    %v943 = vand.u32 2147483647, %v877
    %v944 = vand.u32 2147483647, %v896
    %v945 = vand.u32 2147483647, %v915
    %v946 = vand.u32 2147483647, %v861
    %v947 = vand.u32 2147483647, %v880
    %v948 = vand.u32 2147483647, %v899
    %v949 = vand.u32 2147483647, %v918
    %v950 = vand.u32 2147483647, %v863
    %v951 = vand.u32 2147483647, %v882
    %v952 = vand.u32 2147483647, %v901
    %v953 = vand.u32 2147483647, %v920
    %v954 = vsub.f32 0.0, %v938
    %v955 = vsub.f32 0.0, %v939
    %v956 = vsub.f32 0.0, %v940
    %v957 = vsub.f32 0.0, %v941
    %v958 = vsub.f32 0.0, %v942
    %v959 = vsub.f32 0.0, %v943
    %v960 = vsub.f32 0.0, %v944
    %v961 = vsub.f32 0.0, %v945
    %v962 = vsub.f32 0.0, %v946
    %v963 = vsub.f32 0.0, %v947
    %v964 = vsub.f32 0.0, %v948
    %v965 = vsub.f32 0.0, %v949
    %v966 = vsub.f32 0.0, %v950
    %v967 = vsub.f32 0.0, %v951
    %v968 = vsub.f32 0.0, %v952
    %v969 = vsub.f32 0.0, %v953
    %v970 = vmul.f32 %v954, 1.442695
    %v971 = vpow.pop %v970
    %v972 = vmul.f32 %v955, 1.442695
    %v973 = vpow.pop %v972
    %v974 = vmul.f32 %v956, 1.442695
    %v975 = vpow.pop %v974
    %v976 = vmul.f32 %v957, 1.442695
    %v977 = vpow.pop %v976
    %v978 = vmul.f32 %v958, 1.442695
    %v979 = vpow.pop %v978
    %v980 = vmul.f32 %v959, 1.442695
    %v981 = vpow.pop %v980
    %v982 = vmul.f32 %v960, 1.442695
    %v983 = vpow.pop %v982
    %v984 = vmul.f32 %v961, 1.442695
    %v985 = vpow.pop %v984
    %v986 = vmul.f32 %v962, 1.442695
    %v987 = vpow.pop %v986
    %v988 = vmul.f32 %v963, 1.442695
    %v989 = vpow.pop %v988
    %v990 = vmul.f32 %v964, 1.442695
    %v991 = vpow.pop %v990
    %v992 = vmul.f32 %v965, 1.442695
    %v993 = vpow.pop %v992
    %v994 = vmul.f32 %v966, 1.442695
    %v995 = vpow.pop %v994
    %v996 = vmul.f32 %v967, 1.442695
    %v997 = vpow.pop %v996
    %v998 = vmul.f32 %v968, 1.442695
    %v999 = vpow.pop %v998
    %v1000 = vmul.f32 %v969, 1.442695
    %v1001 = vpow.pop %v1000
    %v1002 = vadd.f32 %v971, 1.0
    %v1003 = vlog2.pop %v1002
    %v1004 = vmul.f32 %v1003, 0.6931472
    %v1005 = vmul.f32 -0.5, %v971
    %v1006 = vadd.f32 %v1005, 1.0
    %v1007 = vmul.f32 %v1006, %v971
    %v1008 = vand.u32 2147483647, %v971
    %vm1009 = vcmp.lt.f32.partialorder %v1008, 0.0004427343
    %v1010 = vsel %vm1009, %v1007, %v1004
    %v1011 = vadd.f32 %v973, 1.0
    %v1012 = vlog2.pop %v1011
    %v1013 = vmul.f32 %v1012, 0.6931472
    %v1014 = vmul.f32 -0.5, %v973
    %v1015 = vadd.f32 %v1014, 1.0
    %v1016 = vmul.f32 %v1015, %v973
    %v1017 = vand.u32 2147483647, %v973
    %vm1018 = vcmp.lt.f32.partialorder %v1017, 0.0004427343
    %v1019 = vsel %vm1018, %v1016, %v1013
    %v1020 = vadd.f32 %v975, 1.0
    %v1021 = vlog2.pop %v1020
    %v1022 = vmul.f32 %v1021, 0.6931472
    %v1023 = vmul.f32 -0.5, %v975
    %v1024 = vadd.f32 %v1023, 1.0
    %v1025 = vmul.f32 %v1024, %v975
    %v1026 = vand.u32 2147483647, %v975
    %vm1027 = vcmp.lt.f32.partialorder %v1026, 0.0004427343
    %v1028 = vsel %vm1027, %v1025, %v1022
    %v1029 = vadd.f32 %v977, 1.0
    %v1030 = vlog2.pop %v1029
    %v1031 = vmul.f32 %v1030, 0.6931472
    %v1032 = vmul.f32 -0.5, %v977
    %v1033 = vadd.f32 %v1032, 1.0
    %v1034 = vmul.f32 %v1033, %v977
    %v1035 = vand.u32 2147483647, %v977
    %vm1036 = vcmp.lt.f32.partialorder %v1035, 0.0004427343
    %v1037 = vsel %vm1036, %v1034, %v1031
    %v1038 = vadd.f32 %v979, 1.0
    %v1039 = vlog2.pop %v1038
    %v1040 = vmul.f32 %v1039, 0.6931472
    %v1041 = vmul.f32 -0.5, %v979
    %v1042 = vadd.f32 %v1041, 1.0
    %v1043 = vmul.f32 %v1042, %v979
    %v1044 = vand.u32 2147483647, %v979
    %vm1045 = vcmp.lt.f32.partialorder %v1044, 0.0004427343
    %v1046 = vsel %vm1045, %v1043, %v1040
    %v1047 = vadd.f32 %v981, 1.0
    %v1048 = vlog2.pop %v1047
    %v1049 = vmul.f32 %v1048, 0.6931472
    %v1050 = vmul.f32 -0.5, %v981
    %v1051 = vadd.f32 %v1050, 1.0
    %v1052 = vmul.f32 %v1051, %v981
    %v1053 = vand.u32 2147483647, %v981
    %vm1054 = vcmp.lt.f32.partialorder %v1053, 0.0004427343
    %v1055 = vsel %vm1054, %v1052, %v1049
    %v1056 = vadd.f32 %v983, 1.0
    %v1057 = vlog2.pop %v1056
    %v1058 = vmul.f32 %v1057, 0.6931472
    %v1059 = vmul.f32 -0.5, %v983
    %v1060 = vadd.f32 %v1059, 1.0
    %v1061 = vmul.f32 %v1060, %v983
    %v1062 = vand.u32 2147483647, %v983
    %vm1063 = vcmp.lt.f32.partialorder %v1062, 0.0004427343
    %v1064 = vsel %vm1063, %v1061, %v1058
    %v1065 = vadd.f32 %v985, 1.0
    %v1066 = vlog2.pop %v1065
    %v1067 = vmul.f32 %v1066, 0.6931472
    %v1068 = vmul.f32 -0.5, %v985
    %v1069 = vadd.f32 %v1068, 1.0
    %v1070 = vmul.f32 %v1069, %v985
    %v1071 = vand.u32 2147483647, %v985
    %vm1072 = vcmp.lt.f32.partialorder %v1071, 0.0004427343
    %v1073 = vsel %vm1072, %v1070, %v1067
    %v1074 = vadd.f32 %v987, 1.0
    %v1075 = vlog2.pop %v1074
    %v1076 = vmul.f32 %v1075, 0.6931472
    %v1077 = vmul.f32 -0.5, %v987
    %v1078 = vadd.f32 %v1077, 1.0
    %v1079 = vmul.f32 %v1078, %v987
    %v1080 = vand.u32 2147483647, %v987
    %vm1081 = vcmp.lt.f32.partialorder %v1080, 0.0004427343
    %v1082 = vsel %vm1081, %v1079, %v1076
    %v1083 = vadd.f32 %v989, 1.0
    %v1084 = vlog2.pop %v1083
    %v1085 = vmul.f32 %v1084, 0.6931472
    %v1086 = vmul.f32 -0.5, %v989
    %v1087 = vadd.f32 %v1086, 1.0
    %v1088 = vmul.f32 %v1087, %v989
    %v1089 = vand.u32 2147483647, %v989
    %vm1090 = vcmp.lt.f32.partialorder %v1089, 0.0004427343
    %v1091 = vsel %vm1090, %v1088, %v1085
    %v1092 = vadd.f32 %v991, 1.0
    %v1093 = vlog2.pop %v1092
    %v1094 = vmul.f32 %v1093, 0.6931472
    %v1095 = vmul.f32 -0.5, %v991
    %v1096 = vadd.f32 %v1095, 1.0
    %v1097 = vmul.f32 %v1096, %v991
    %v1098 = vand.u32 2147483647, %v991
    %vm1099 = vcmp.lt.f32.partialorder %v1098, 0.0004427343
    %v1100 = vsel %vm1099, %v1097, %v1094
    %v1101 = vadd.f32 %v993, 1.0
    %v1102 = vlog2.pop %v1101
    %v1103 = vmul.f32 %v1102, 0.6931472
    %v1104 = vmul.f32 -0.5, %v993
    %v1105 = vadd.f32 %v1104, 1.0
    %v1106 = vmul.f32 %v1105, %v993
    %v1107 = vand.u32 2147483647, %v993
    %vm1108 = vcmp.lt.f32.partialorder %v1107, 0.0004427343
    %v1109 = vsel %vm1108, %v1106, %v1103
    %v1110 = vadd.f32 %v995, 1.0
    %v1111 = vlog2.pop %v1110
    %v1112 = vmul.f32 %v1111, 0.6931472
    %v1113 = vmul.f32 -0.5, %v995
    %v1114 = vadd.f32 %v1113, 1.0
    %v1115 = vmul.f32 %v1114, %v995
    %v1116 = vand.u32 2147483647, %v995
    %vm1117 = vcmp.lt.f32.partialorder %v1116, 0.0004427343
    %v1118 = vsel %vm1117, %v1115, %v1112
    %v1119 = vadd.f32 %v997, 1.0
    %v1120 = vlog2.pop %v1119
    %v1121 = vmul.f32 %v1120, 0.6931472
    %v1122 = vmul.f32 -0.5, %v997
    %v1123 = vadd.f32 %v1122, 1.0
    %v1124 = vmul.f32 %v1123, %v997
    %v1125 = vand.u32 2147483647, %v997
    %vm1126 = vcmp.lt.f32.partialorder %v1125, 0.0004427343
    %v1127 = vsel %vm1126, %v1124, %v1121
    %v1128 = vadd.f32 %v999, 1.0
    %v1129 = vlog2.pop %v1128
    %v1130 = vmul.f32 %v1129, 0.6931472
    %v1131 = vmul.f32 -0.5, %v999
    %v1132 = vadd.f32 %v1131, 1.0
    %v1133 = vmul.f32 %v1132, %v999
    %v1134 = vand.u32 2147483647, %v999
    %vm1135 = vcmp.lt.f32.partialorder %v1134, 0.0004427343
    %v1136 = vsel %vm1135, %v1133, %v1130
    %v1137 = vadd.f32 %v1001, 1.0
    %v1138 = vlog2.pop %v1137
    %v1139 = vmul.f32 %v1138, 0.6931472
    %v1140 = vmul.f32 -0.5, %v1001
    %v1141 = vadd.f32 %v1140, 1.0
    %v1142 = vmul.f32 %v1141, %v1001
    %v1143 = vand.u32 2147483647, %v1001
    %vm1144 = vcmp.lt.f32.partialorder %v1143, 0.0004427343
    %v1145 = vsel %vm1144, %v1142, %v1139
    %v1146 = vadd.f32 %v922, %v1010
    %v1147 = vadd.f32 %v923, %v1019
    %v1148 = vadd.f32 %v924, %v1028
    %v1149 = vadd.f32 %v925, %v1037
    %v1150 = vadd.f32 %v926, %v1046
    %v1151 = vadd.f32 %v927, %v1055
    %v1152 = vadd.f32 %v928, %v1064
    %v1153 = vadd.f32 %v929, %v1073
    %v1154 = vadd.f32 %v930, %v1082
    %v1155 = vadd.f32 %v931, %v1091
    %v1156 = vadd.f32 %v932, %v1100
    %v1157 = vadd.f32 %v933, %v1109
    %v1158 = vadd.f32 %v934, %v1118
    %v1159 = vadd.f32 %v935, %v1127
    %v1160 = vadd.f32 %v936, %v1136
    %v1161 = vadd.f32 %v937, %v1145
    %v1162 = vld [vmem:[%s7] sm:$0xf]
    %v1163 = vld [vmem:[%s7 + $0x4] sm:$0xf]
    %v1164 = vld [vmem:[%s7 + $0x8] sm:$0xf]
    %v1165 = vld [vmem:[%s7 + $0xc] sm:$0xf]
    %v1166 = vpack.c.bf16 %v1150, %v1146
    %v1167 = vpack.c.bf16 %v1151, %v1147
    %v1168 = vpack.c.bf16 %v1152, %v1148
    %v1169 = vpack.c.bf16 %v1153, %v1149
    %v1170 = vpack.c.bf16 %v1158, %v1154
    %v1171 = vpack.c.bf16 %v1159, %v1155
    %v1172 = vpack.c.bf16 %v1160, %v1156
    %v1173 = vpack.c.bf16 %v1161, %v1157
    %v1174 = vld [vmem:[%s8] sm:$0xff]
    %v1175 = vld [vmem:[%s8 + $0x8] sm:$0xff]
    %v1176 = vld [vmem:[%s8 + $0x10] sm:$0xff]
    %v1177 = vld [vmem:[%s8 + $0x18] sm:$0xff]
    %1179 = vset.pattern.permute.xlu0 0
    %1180 = vperm.xlu0 %1179, %v1174
    %v1181 = vpop.permute.xlu0 %1180
    %1184 = vset.pattern.permute.xlu0 0
    %1185 = vperm.xlu0 %1184, %v1175
    %v1186 = vpop.permute.xlu0 %1185
    %1189 = vset.pattern.permute.xlu0 0
    %1190 = vperm.xlu0 %1189, %v1176
    %v1191 = vpop.permute.xlu0 %1190
    %1194 = vset.pattern.permute.xlu0 0
    %1195 = vperm.xlu0 %1194, %v1177
    %v1196 = vpop.permute.xlu0 %1195
    %v1202 = vunpack.c.l.b16 %v1162
    %v1203 = vunpack.c.l.b16 %v1163
    %v1204 = vunpack.c.l.b16 %v1164
    %v1205 = vunpack.c.l.b16 %v1165
    %v1206 = vpack.c.b16 %v1203, %v1202
    %v1207 = vpack.c.b16 %v1205, %v1204
    %v1209 = vsel %vm471, %v1206, 0
    %v1212 = vsel %vm471, %v1207, 0
    %1214 = vmatpush.bf16.msra.mxu0 0
    %1215 = vmatpush.bf16.msra.mxu0 0
    %1216 = vmatpush.bf16.msra.mxu0 0
    %1217 = vmatpush.bf16.msra.mxu0 0
    %1218 = vmatpush.bf16.msra.mxu0 0
    %1219 = vmatpush.bf16.msra.mxu0 0
    %1220 = vmatpush.bf16.msra.mxu0 %v1170
    %1221 = vmatpush.bf16.msra.mxu0 %v1166
    %1222 = vmatmul.bf16.gmra.mxu0 %v1209
    %v1223 = vpop.f32.mrf.mxu0
    %v1224 = vadd.f32 %v1181, %v1223
    %v1225 = vpop.f32.mrf.mxu0
    %v1226 = vadd.f32 %v1186, %v1225
    %1227 = vmatmul.bf16.gmra.mxu0 %v1212
    %v1228 = vpop.f32.mrf.mxu0
    %v1229 = vadd.f32 %v1191, %v1228
    %v1230 = vpop.f32.mrf.mxu0
    %v1231 = vadd.f32 %v1196, %v1230
    %1232 = vdwg.mxu0
    %1233 = vmatpush.bf16.msra.mxu0 0
    %1234 = vmatpush.bf16.msra.mxu0 0
    %1235 = vmatpush.bf16.msra.mxu0 0
    %1236 = vmatpush.bf16.msra.mxu0 0
    %1237 = vmatpush.bf16.msra.mxu0 0
    %1238 = vmatpush.bf16.msra.mxu0 0
    %1239 = vmatpush.bf16.msra.mxu0 %v1171
    %1240 = vmatpush.bf16.msra.mxu0 %v1167
    %1241 = vmatmul.bf16.gmra.mxu0 %v1209
    %v1242 = vpop.f32.mrf.mxu0
    %v1243 = vadd.f32 %v1181, %v1242
    %v1244 = vpop.f32.mrf.mxu0
    %v1245 = vadd.f32 %v1186, %v1244
    %1246 = vmatmul.bf16.gmra.mxu0 %v1212
    %v1247 = vpop.f32.mrf.mxu0
    %v1248 = vadd.f32 %v1191, %v1247
    %v1249 = vpop.f32.mrf.mxu0
    %v1250 = vadd.f32 %v1196, %v1249
    %1251 = vdwg.mxu0
    %1252 = vmatpush.bf16.msra.mxu0 0
    %1253 = vmatpush.bf16.msra.mxu0 0
    %1254 = vmatpush.bf16.msra.mxu0 0
    %1255 = vmatpush.bf16.msra.mxu0 0
    %1256 = vmatpush.bf16.msra.mxu0 0
    %1257 = vmatpush.bf16.msra.mxu0 0
    %1258 = vmatpush.bf16.msra.mxu0 %v1172
    %1259 = vmatpush.bf16.msra.mxu0 %v1168
    %1260 = vmatmul.bf16.gmra.mxu0 %v1209
    %v1261 = vpop.f32.mrf.mxu0
    %v1262 = vadd.f32 %v1181, %v1261
    %v1263 = vpop.f32.mrf.mxu0
    %v1264 = vadd.f32 %v1186, %v1263
    %1265 = vmatmul.bf16.gmra.mxu0 %v1212
    %v1266 = vpop.f32.mrf.mxu0
    %v1267 = vadd.f32 %v1191, %v1266
    %v1268 = vpop.f32.mrf.mxu0
    %v1269 = vadd.f32 %v1196, %v1268
    %1270 = vdwg.mxu0
    %1271 = vmatpush.bf16.msra.mxu0 0
    %1272 = vmatpush.bf16.msra.mxu0 0
    %1273 = vmatpush.bf16.msra.mxu0 0
    %1274 = vmatpush.bf16.msra.mxu0 0
    %1275 = vmatpush.bf16.msra.mxu0 0
    %1276 = vmatpush.bf16.msra.mxu0 0
    %1277 = vmatpush.bf16.msra.mxu0 %v1173
    %1278 = vmatpush.bf16.msra.mxu0 %v1169
    %1279 = vmatmul.bf16.gmra.mxu0 %v1209
    %v1280 = vpop.f32.mrf.mxu0
    %v1281 = vadd.f32 %v1181, %v1280
    %v1282 = vpop.f32.mrf.mxu0
    %v1283 = vadd.f32 %v1186, %v1282
    %1284 = vmatmul.bf16.gmra.mxu0 %v1212
    %v1285 = vpop.f32.mrf.mxu0
    %v1286 = vadd.f32 %v1191, %v1285
    %v1287 = vpop.f32.mrf.mxu0
    %v1288 = vadd.f32 %v1196, %v1287
    %1289 = vdwg.mxu0
    %v1290 = vmax.f32 %v1224, 0.0
    %v1291 = vmax.f32 %v1243, 0.0
    %v1292 = vmax.f32 %v1262, 0.0
    %v1293 = vmax.f32 %v1281, 0.0
    %v1294 = vmax.f32 %v1226, 0.0
    %v1295 = vmax.f32 %v1245, 0.0
    %v1296 = vmax.f32 %v1264, 0.0
    %v1297 = vmax.f32 %v1283, 0.0
    %v1298 = vmax.f32 %v1229, 0.0
    %v1299 = vmax.f32 %v1248, 0.0
    %v1300 = vmax.f32 %v1267, 0.0
    %v1301 = vmax.f32 %v1286, 0.0
    %v1302 = vmax.f32 %v1231, 0.0
    %v1303 = vmax.f32 %v1250, 0.0
    %v1304 = vmax.f32 %v1269, 0.0
    %v1305 = vmax.f32 %v1288, 0.0
    %v1306 = vand.u32 2147483647, %v1224
    %v1307 = vand.u32 2147483647, %v1243
    %v1308 = vand.u32 2147483647, %v1262
    %v1309 = vand.u32 2147483647, %v1281
    %v1310 = vand.u32 2147483647, %v1226
    %v1311 = vand.u32 2147483647, %v1245
    %v1312 = vand.u32 2147483647, %v1264
    %v1313 = vand.u32 2147483647, %v1283
    %v1314 = vand.u32 2147483647, %v1229
    %v1315 = vand.u32 2147483647, %v1248
    %v1316 = vand.u32 2147483647, %v1267
    %v1317 = vand.u32 2147483647, %v1286
    %v1318 = vand.u32 2147483647, %v1231
    %v1319 = vand.u32 2147483647, %v1250
    %v1320 = vand.u32 2147483647, %v1269
    %v1321 = vand.u32 2147483647, %v1288
    %v1322 = vsub.f32 0.0, %v1306
    %v1323 = vsub.f32 0.0, %v1307
    %v1324 = vsub.f32 0.0, %v1308
    %v1325 = vsub.f32 0.0, %v1309
    %v1326 = vsub.f32 0.0, %v1310
    %v1327 = vsub.f32 0.0, %v1311
    %v1328 = vsub.f32 0.0, %v1312
    %v1329 = vsub.f32 0.0, %v1313
    %v1330 = vsub.f32 0.0, %v1314
    %v1331 = vsub.f32 0.0, %v1315
    %v1332 = vsub.f32 0.0, %v1316
    %v1333 = vsub.f32 0.0, %v1317
    %v1334 = vsub.f32 0.0, %v1318
    %v1335 = vsub.f32 0.0, %v1319
    %v1336 = vsub.f32 0.0, %v1320
    %v1337 = vsub.f32 0.0, %v1321
    %v1338 = vmul.f32 %v1322, 1.442695
    %v1339 = vpow.pop %v1338
    %v1340 = vmul.f32 %v1323, 1.442695
    %v1341 = vpow.pop %v1340
    %v1342 = vmul.f32 %v1324, 1.442695
    %v1343 = vpow.pop %v1342
    %v1344 = vmul.f32 %v1325, 1.442695
    %v1345 = vpow.pop %v1344
    %v1346 = vmul.f32 %v1326, 1.442695
    %v1347 = vpow.pop %v1346
    %v1348 = vmul.f32 %v1327, 1.442695
    %v1349 = vpow.pop %v1348
    %v1350 = vmul.f32 %v1328, 1.442695
    %v1351 = vpow.pop %v1350
    %v1352 = vmul.f32 %v1329, 1.442695
    %v1353 = vpow.pop %v1352
    %v1354 = vmul.f32 %v1330, 1.442695
    %v1355 = vpow.pop %v1354
    %v1356 = vmul.f32 %v1331, 1.442695
    %v1357 = vpow.pop %v1356
    %v1358 = vmul.f32 %v1332, 1.442695
    %v1359 = vpow.pop %v1358
    %v1360 = vmul.f32 %v1333, 1.442695
    %v1361 = vpow.pop %v1360
    %v1362 = vmul.f32 %v1334, 1.442695
    %v1363 = vpow.pop %v1362
    %v1364 = vmul.f32 %v1335, 1.442695
    %v1365 = vpow.pop %v1364
    %v1366 = vmul.f32 %v1336, 1.442695
    %v1367 = vpow.pop %v1366
    %v1368 = vmul.f32 %v1337, 1.442695
    %v1369 = vpow.pop %v1368
    %v1370 = vadd.f32 %v1339, 1.0
    %v1371 = vlog2.pop %v1370
    %v1372 = vmul.f32 %v1371, 0.6931472
    %v1373 = vmul.f32 -0.5, %v1339
    %v1374 = vadd.f32 %v1373, 1.0
    %v1375 = vmul.f32 %v1374, %v1339
    %v1376 = vand.u32 2147483647, %v1339
    %vm1377 = vcmp.lt.f32.partialorder %v1376, 0.0004427343
    %v1378 = vsel %vm1377, %v1375, %v1372
    %v1379 = vadd.f32 %v1341, 1.0
    %v1380 = vlog2.pop %v1379
    %v1381 = vmul.f32 %v1380, 0.6931472
    %v1382 = vmul.f32 -0.5, %v1341
    %v1383 = vadd.f32 %v1382, 1.0
    %v1384 = vmul.f32 %v1383, %v1341
    %v1385 = vand.u32 2147483647, %v1341
    %vm1386 = vcmp.lt.f32.partialorder %v1385, 0.0004427343
    %v1387 = vsel %vm1386, %v1384, %v1381
    %v1388 = vadd.f32 %v1343, 1.0
    %v1389 = vlog2.pop %v1388
    %v1390 = vmul.f32 %v1389, 0.6931472
    %v1391 = vmul.f32 -0.5, %v1343
    %v1392 = vadd.f32 %v1391, 1.0
    %v1393 = vmul.f32 %v1392, %v1343
    %v1394 = vand.u32 2147483647, %v1343
    %vm1395 = vcmp.lt.f32.partialorder %v1394, 0.0004427343
    %v1396 = vsel %vm1395, %v1393, %v1390
    %v1397 = vadd.f32 %v1345, 1.0
    %v1398 = vlog2.pop %v1397
    %v1399 = vmul.f32 %v1398, 0.6931472
    %v1400 = vmul.f32 -0.5, %v1345
    %v1401 = vadd.f32 %v1400, 1.0
    %v1402 = vmul.f32 %v1401, %v1345
    %v1403 = vand.u32 2147483647, %v1345
    %vm1404 = vcmp.lt.f32.partialorder %v1403, 0.0004427343
    %v1405 = vsel %vm1404, %v1402, %v1399
    %v1406 = vadd.f32 %v1347, 1.0
    %v1407 = vlog2.pop %v1406
    %v1408 = vmul.f32 %v1407, 0.6931472
    %v1409 = vmul.f32 -0.5, %v1347
    %v1410 = vadd.f32 %v1409, 1.0
    %v1411 = vmul.f32 %v1410, %v1347
    %v1412 = vand.u32 2147483647, %v1347
    %vm1413 = vcmp.lt.f32.partialorder %v1412, 0.0004427343
    %v1414 = vsel %vm1413, %v1411, %v1408
    %v1415 = vadd.f32 %v1349, 1.0
    %v1416 = vlog2.pop %v1415
    %v1417 = vmul.f32 %v1416, 0.6931472
    %v1418 = vmul.f32 -0.5, %v1349
    %v1419 = vadd.f32 %v1418, 1.0
    %v1420 = vmul.f32 %v1419, %v1349
    %v1421 = vand.u32 2147483647, %v1349
    %vm1422 = vcmp.lt.f32.partialorder %v1421, 0.0004427343
    %v1423 = vsel %vm1422, %v1420, %v1417
    %v1424 = vadd.f32 %v1351, 1.0
    %v1425 = vlog2.pop %v1424
    %v1426 = vmul.f32 %v1425, 0.6931472
    %v1427 = vmul.f32 -0.5, %v1351
    %v1428 = vadd.f32 %v1427, 1.0
    %v1429 = vmul.f32 %v1428, %v1351
    %v1430 = vand.u32 2147483647, %v1351
    %vm1431 = vcmp.lt.f32.partialorder %v1430, 0.0004427343
    %v1432 = vsel %vm1431, %v1429, %v1426
    %v1433 = vadd.f32 %v1353, 1.0
    %v1434 = vlog2.pop %v1433
    %v1435 = vmul.f32 %v1434, 0.6931472
    %v1436 = vmul.f32 -0.5, %v1353
    %v1437 = vadd.f32 %v1436, 1.0
    %v1438 = vmul.f32 %v1437, %v1353
    %v1439 = vand.u32 2147483647, %v1353
    %vm1440 = vcmp.lt.f32.partialorder %v1439, 0.0004427343
    %v1441 = vsel %vm1440, %v1438, %v1435
    %v1442 = vadd.f32 %v1355, 1.0
    %v1443 = vlog2.pop %v1442
    %v1444 = vmul.f32 %v1443, 0.6931472
    %v1445 = vmul.f32 -0.5, %v1355
    %v1446 = vadd.f32 %v1445, 1.0
    %v1447 = vmul.f32 %v1446, %v1355
    %v1448 = vand.u32 2147483647, %v1355
    %vm1449 = vcmp.lt.f32.partialorder %v1448, 0.0004427343
    %v1450 = vsel %vm1449, %v1447, %v1444
    %v1451 = vadd.f32 %v1357, 1.0
    %v1452 = vlog2.pop %v1451
    %v1453 = vmul.f32 %v1452, 0.6931472
    %v1454 = vmul.f32 -0.5, %v1357
    %v1455 = vadd.f32 %v1454, 1.0
    %v1456 = vmul.f32 %v1455, %v1357
    %v1457 = vand.u32 2147483647, %v1357
    %vm1458 = vcmp.lt.f32.partialorder %v1457, 0.0004427343
    %v1459 = vsel %vm1458, %v1456, %v1453
    %v1460 = vadd.f32 %v1359, 1.0
    %v1461 = vlog2.pop %v1460
    %v1462 = vmul.f32 %v1461, 0.6931472
    %v1463 = vmul.f32 -0.5, %v1359
    %v1464 = vadd.f32 %v1463, 1.0
    %v1465 = vmul.f32 %v1464, %v1359
    %v1466 = vand.u32 2147483647, %v1359
    %vm1467 = vcmp.lt.f32.partialorder %v1466, 0.0004427343
    %v1468 = vsel %vm1467, %v1465, %v1462
    %v1469 = vadd.f32 %v1361, 1.0
    %v1470 = vlog2.pop %v1469
    %v1471 = vmul.f32 %v1470, 0.6931472
    %v1472 = vmul.f32 -0.5, %v1361
    %v1473 = vadd.f32 %v1472, 1.0
    %v1474 = vmul.f32 %v1473, %v1361
    %v1475 = vand.u32 2147483647, %v1361
    %vm1476 = vcmp.lt.f32.partialorder %v1475, 0.0004427343
    %v1477 = vsel %vm1476, %v1474, %v1471
    %v1478 = vadd.f32 %v1363, 1.0
    %v1479 = vlog2.pop %v1478
    %v1480 = vmul.f32 %v1479, 0.6931472
    %v1481 = vmul.f32 -0.5, %v1363
    %v1482 = vadd.f32 %v1481, 1.0
    %v1483 = vmul.f32 %v1482, %v1363
    %v1484 = vand.u32 2147483647, %v1363
    %vm1485 = vcmp.lt.f32.partialorder %v1484, 0.0004427343
    %v1486 = vsel %vm1485, %v1483, %v1480
    %v1487 = vadd.f32 %v1365, 1.0
    %v1488 = vlog2.pop %v1487
    %v1489 = vmul.f32 %v1488, 0.6931472
    %v1490 = vmul.f32 -0.5, %v1365
    %v1491 = vadd.f32 %v1490, 1.0
    %v1492 = vmul.f32 %v1491, %v1365
    %v1493 = vand.u32 2147483647, %v1365
    %vm1494 = vcmp.lt.f32.partialorder %v1493, 0.0004427343
    %v1495 = vsel %vm1494, %v1492, %v1489
    %v1496 = vadd.f32 %v1367, 1.0
    %v1497 = vlog2.pop %v1496
    %v1498 = vmul.f32 %v1497, 0.6931472
    %v1499 = vmul.f32 -0.5, %v1367
    %v1500 = vadd.f32 %v1499, 1.0
    %v1501 = vmul.f32 %v1500, %v1367
    %v1502 = vand.u32 2147483647, %v1367
    %vm1503 = vcmp.lt.f32.partialorder %v1502, 0.0004427343
    %v1504 = vsel %vm1503, %v1501, %v1498
    %v1505 = vadd.f32 %v1369, 1.0
    %v1506 = vlog2.pop %v1505
    %v1507 = vmul.f32 %v1506, 0.6931472
    %v1508 = vmul.f32 -0.5, %v1369
    %v1509 = vadd.f32 %v1508, 1.0
    %v1510 = vmul.f32 %v1509, %v1369
    %v1511 = vand.u32 2147483647, %v1369
    %vm1512 = vcmp.lt.f32.partialorder %v1511, 0.0004427343
    %v1513 = vsel %vm1512, %v1510, %v1507
    %v1514 = vadd.f32 %v1290, %v1378
    %v1515 = vadd.f32 %v1291, %v1387
    %v1516 = vadd.f32 %v1292, %v1396
    %v1517 = vadd.f32 %v1293, %v1405
    %v1518 = vadd.f32 %v1294, %v1414
    %v1519 = vadd.f32 %v1295, %v1423
    %v1520 = vadd.f32 %v1296, %v1432
    %v1521 = vadd.f32 %v1297, %v1441
    %v1522 = vadd.f32 %v1298, %v1450
    %v1523 = vadd.f32 %v1299, %v1459
    %v1524 = vadd.f32 %v1300, %v1468
    %v1525 = vadd.f32 %v1301, %v1477
    %v1526 = vadd.f32 %v1302, %v1486
    %v1527 = vadd.f32 %v1303, %v1495
    %v1528 = vadd.f32 %v1304, %v1504
    %v1529 = vadd.f32 %v1305, %v1513
    %v1530 = vld [vmem:[%s9] sm:$0xf]
    %v1531 = vld [vmem:[%s9 + $0x4] sm:$0xf]
    %v1532 = vld [vmem:[%s9 + $0x8] sm:$0xf]
    %v1533 = vld [vmem:[%s9 + $0xc] sm:$0xf]
    %v1534 = vpack.c.bf16 %v1518, %v1514
    %v1535 = vpack.c.bf16 %v1519, %v1515
    %v1536 = vpack.c.bf16 %v1520, %v1516
    %v1537 = vpack.c.bf16 %v1521, %v1517
    %v1538 = vpack.c.bf16 %v1526, %v1522
    %v1539 = vpack.c.bf16 %v1527, %v1523
    %v1540 = vpack.c.bf16 %v1528, %v1524
    %v1541 = vpack.c.bf16 %v1529, %v1525
    %v1546 = vunpack.c.l.b16 %v1530
    %v1547 = vunpack.c.l.b16 %v1531
    %v1548 = vunpack.c.l.b16 %v1532
    %v1549 = vunpack.c.l.b16 %v1533
    %v1550 = vpack.c.b16 %v1547, %v1546
    %v1551 = vpack.c.b16 %v1549, %v1548
    %1552 = vrot.lane.b32.xlu0 %v1550, 112
    %v1553 = vpop.permute.xlu0 %1552
    %1554 = vrot.lane.b32.xlu0 %v1551, 112
    %v1555 = vpop.permute.xlu0 %1554
    %v1557 = vsel %vm471, %v1553, 0
    %v1560 = vsel %vm471, %v1555, 0
    %1562 = vmatpush.bf16.msra.mxu0 0
    %1563 = vmatpush.bf16.msra.mxu0 0
    %1564 = vmatpush.bf16.msra.mxu0 0
    %1565 = vmatpush.bf16.msra.mxu0 0
    %1566 = vmatpush.bf16.msra.mxu0 0
    %1567 = vmatpush.bf16.msra.mxu0 0
    %1568 = vmatpush.bf16.msra.mxu0 %v1538
    %1569 = vmatpush.bf16.msra.mxu0 %v1534
    %1570 = vmatmul.bf16.gmra.mxu0 %v1557
    %v1571 = vpop.f32.mrf.mxu0
    %v1572 = vadd.f32 0.0, %v1571
    %v1573 = vpop.f32.mrf.mxu0
    %v1574 = vadd.f32 0.0, %v1573
    %1575 = vmatmul.bf16.gmra.mxu0 %v1560
    %v1576 = vpop.f32.mrf.mxu0
    %v1577 = vadd.f32 0.0, %v1576
    %v1578 = vpop.f32.mrf.mxu0
    %v1579 = vadd.f32 0.0, %v1578
    %1580 = vdwg.mxu0
    %1581 = vmatpush.bf16.msra.mxu0 0
    %1582 = vmatpush.bf16.msra.mxu0 0
    %1583 = vmatpush.bf16.msra.mxu0 0
    %1584 = vmatpush.bf16.msra.mxu0 0
    %1585 = vmatpush.bf16.msra.mxu0 0
    %1586 = vmatpush.bf16.msra.mxu0 0
    %1587 = vmatpush.bf16.msra.mxu0 %v1539
    %1588 = vmatpush.bf16.msra.mxu0 %v1535
    %1589 = vmatmul.bf16.gmra.mxu0 %v1557
    %v1590 = vpop.f32.mrf.mxu0
    %v1591 = vadd.f32 0.0, %v1590
    %v1592 = vpop.f32.mrf.mxu0
    %v1593 = vadd.f32 0.0, %v1592
    %1594 = vmatmul.bf16.gmra.mxu0 %v1560
    %v1595 = vpop.f32.mrf.mxu0
    %v1596 = vadd.f32 0.0, %v1595
    %v1597 = vpop.f32.mrf.mxu0
    %v1598 = vadd.f32 0.0, %v1597
    %1599 = vdwg.mxu0
    %1600 = vmatpush.bf16.msra.mxu0 0
    %1601 = vmatpush.bf16.msra.mxu0 0
    %1602 = vmatpush.bf16.msra.mxu0 0
    %1603 = vmatpush.bf16.msra.mxu0 0
    %1604 = vmatpush.bf16.msra.mxu0 0
    %1605 = vmatpush.bf16.msra.mxu0 0
    %1606 = vmatpush.bf16.msra.mxu0 %v1540
    %1607 = vmatpush.bf16.msra.mxu0 %v1536
    %1608 = vmatmul.bf16.gmra.mxu0 %v1557
    %v1609 = vpop.f32.mrf.mxu0
    %v1610 = vadd.f32 0.0, %v1609
    %v1611 = vpop.f32.mrf.mxu0
    %v1612 = vadd.f32 0.0, %v1611
    %1613 = vmatmul.bf16.gmra.mxu0 %v1560
    %v1614 = vpop.f32.mrf.mxu0
    %v1615 = vadd.f32 0.0, %v1614
    %v1616 = vpop.f32.mrf.mxu0
    %v1617 = vadd.f32 0.0, %v1616
    %1618 = vdwg.mxu0
    %1619 = vmatpush.bf16.msra.mxu0 0
    %1620 = vmatpush.bf16.msra.mxu0 0
    %1621 = vmatpush.bf16.msra.mxu0 0
    %1622 = vmatpush.bf16.msra.mxu0 0
    %1623 = vmatpush.bf16.msra.mxu0 0
    %1624 = vmatpush.bf16.msra.mxu0 0
    %1625 = vmatpush.bf16.msra.mxu0 %v1541
    %1626 = vmatpush.bf16.msra.mxu0 %v1537
    %1627 = vmatmul.bf16.gmra.mxu0 %v1557
    %v1628 = vpop.f32.mrf.mxu0
    %v1629 = vadd.f32 0.0, %v1628
    %v1630 = vpop.f32.mrf.mxu0
    %v1631 = vadd.f32 0.0, %v1630
    %1632 = vmatmul.bf16.gmra.mxu0 %v1560
    %v1633 = vpop.f32.mrf.mxu0
    %v1634 = vadd.f32 0.0, %v1633
    %v1635 = vpop.f32.mrf.mxu0
    %v1636 = vadd.f32 0.0, %v1635
    %1637 = vdwg.mxu0
    %v1639 = vsel %vm102, %v1550, 0
    %v1642 = vsel %vm102, %v1551, 0
    %1644 = vmatpush.bf16.msra.mxu0 0
    %1645 = vmatpush.bf16.msra.mxu0 0
    %1646 = vmatpush.bf16.msra.mxu0 0
    %1647 = vmatpush.bf16.msra.mxu0 0
    %1648 = vmatpush.bf16.msra.mxu0 0
    %1649 = vmatpush.bf16.msra.mxu0 0
    %1650 = vmatpush.bf16.msra.mxu0 0
    %1651 = vmatpush.bf16.msra.mxu0 %v60
    %1652 = vmatmul.bf16.gmra.mxu0 %v1639
    %v1653 = vpop.f32.mrf.mxu0
    %v1654 = vadd.f32 %v1572, %v1653
    %v1655 = vpop.f32.mrf.mxu0
    %v1656 = vadd.f32 %v1574, %v1655
    %1657 = vmatmul.bf16.gmra.mxu0 %v1642
    %v1658 = vpop.f32.mrf.mxu0
    %v1659 = vadd.f32 %v1577, %v1658
    %v1660 = vpop.f32.mrf.mxu0
    %v1661 = vadd.f32 %v1579, %v1660
    %1662 = vdwg.mxu0
    %1663 = vmatpush.bf16.msra.mxu0 0
    %1664 = vmatpush.bf16.msra.mxu0 0
    %1665 = vmatpush.bf16.msra.mxu0 0
    %1666 = vmatpush.bf16.msra.mxu0 0
    %1667 = vmatpush.bf16.msra.mxu0 0
    %1668 = vmatpush.bf16.msra.mxu0 0
    %1669 = vmatpush.bf16.msra.mxu0 0
    %1670 = vmatpush.bf16.msra.mxu0 %v61
    %1671 = vmatmul.bf16.gmra.mxu0 %v1639
    %v1672 = vpop.f32.mrf.mxu0
    %v1673 = vadd.f32 %v1591, %v1672
    %v1674 = vpop.f32.mrf.mxu0
    %v1675 = vadd.f32 %v1593, %v1674
    %1676 = vmatmul.bf16.gmra.mxu0 %v1642
    %v1677 = vpop.f32.mrf.mxu0
    %v1678 = vadd.f32 %v1596, %v1677
    %v1679 = vpop.f32.mrf.mxu0
    %v1680 = vadd.f32 %v1598, %v1679
    %1681 = vdwg.mxu0
    %1682 = vmatpush.bf16.msra.mxu0 0
    %1683 = vmatpush.bf16.msra.mxu0 0
    %1684 = vmatpush.bf16.msra.mxu0 0
    %1685 = vmatpush.bf16.msra.mxu0 0
    %1686 = vmatpush.bf16.msra.mxu0 0
    %1687 = vmatpush.bf16.msra.mxu0 0
    %1688 = vmatpush.bf16.msra.mxu0 0
    %1689 = vmatpush.bf16.msra.mxu0 %v62
    %1690 = vmatmul.bf16.gmra.mxu0 %v1639
    %v1691 = vpop.f32.mrf.mxu0
    %v1692 = vadd.f32 %v1610, %v1691
    %v1693 = vpop.f32.mrf.mxu0
    %v1694 = vadd.f32 %v1612, %v1693
    %1695 = vmatmul.bf16.gmra.mxu0 %v1642
    %v1696 = vpop.f32.mrf.mxu0
    %v1697 = vadd.f32 %v1615, %v1696
    %v1698 = vpop.f32.mrf.mxu0
    %v1699 = vadd.f32 %v1617, %v1698
    %1700 = vdwg.mxu0
    %1701 = vmatpush.bf16.msra.mxu0 0
    %1702 = vmatpush.bf16.msra.mxu0 0
    %1703 = vmatpush.bf16.msra.mxu0 0
    %1704 = vmatpush.bf16.msra.mxu0 0
    %1705 = vmatpush.bf16.msra.mxu0 0
    %1706 = vmatpush.bf16.msra.mxu0 0
    %1707 = vmatpush.bf16.msra.mxu0 0
    %1708 = vmatpush.bf16.msra.mxu0 %v63
    %1709 = vmatmul.bf16.gmra.mxu0 %v1639
    %v1710 = vpop.f32.mrf.mxu0
    %v1711 = vadd.f32 %v1629, %v1710
    %v1712 = vpop.f32.mrf.mxu0
    %v1713 = vadd.f32 %v1631, %v1712
    %1714 = vmatmul.bf16.gmra.mxu0 %v1642
    %v1715 = vpop.f32.mrf.mxu0
    %v1716 = vadd.f32 %v1634, %v1715
    %v1717 = vpop.f32.mrf.mxu0
    %v1718 = vadd.f32 %v1636, %v1717
    %1719 = vdwg.mxu0
    %v1720 = vld [vmem:[%s10] sm:$0xff]
    %v1721 = vld [vmem:[%s10 + $0x8] sm:$0xff]
    %v1722 = vld [vmem:[%s10 + $0x10] sm:$0xff]
    %v1723 = vld [vmem:[%s10 + $0x18] sm:$0xff]
    %1725 = vset.pattern.permute.xlu0 0
    %1726 = vperm.xlu0 %1725, %v1720
    %v1727 = vpop.permute.xlu0 %1726
    %1730 = vset.pattern.permute.xlu0 0
    %1731 = vperm.xlu0 %1730, %v1721
    %v1732 = vpop.permute.xlu0 %1731
    %1735 = vset.pattern.permute.xlu0 0
    %1736 = vperm.xlu0 %1735, %v1722
    %v1737 = vpop.permute.xlu0 %1736
    %1740 = vset.pattern.permute.xlu0 0
    %1741 = vperm.xlu0 %1740, %v1723
    %v1742 = vpop.permute.xlu0 %1741
    %v1744 = vadd.f32 %v1654, %v1727
    %v1745 = vadd.f32 %v1673, %v1727
    %v1746 = vadd.f32 %v1692, %v1727
    %v1747 = vadd.f32 %v1711, %v1727
    %v1748 = vadd.f32 %v1656, %v1732
    %v1749 = vadd.f32 %v1675, %v1732
    %v1750 = vadd.f32 %v1694, %v1732
    %v1751 = vadd.f32 %v1713, %v1732
    %v1752 = vadd.f32 %v1659, %v1737
    %v1753 = vadd.f32 %v1678, %v1737
    %v1754 = vadd.f32 %v1697, %v1737
    %v1755 = vadd.f32 %v1716, %v1737
    %v1756 = vadd.f32 %v1661, %v1742
    %v1757 = vadd.f32 %v1680, %v1742
    %v1758 = vadd.f32 %v1699, %v1742
    %v1759 = vadd.f32 %v1718, %v1742
    %v1760 = vmax.f32 %v1744, 0.0
    %v1761 = vmax.f32 %v1745, 0.0
    %v1762 = vmax.f32 %v1746, 0.0
    %v1763 = vmax.f32 %v1747, 0.0
    %v1764 = vmax.f32 %v1748, 0.0
    %v1765 = vmax.f32 %v1749, 0.0
    %v1766 = vmax.f32 %v1750, 0.0
    %v1767 = vmax.f32 %v1751, 0.0
    %v1768 = vmax.f32 %v1752, 0.0
    %v1769 = vmax.f32 %v1753, 0.0
    %v1770 = vmax.f32 %v1754, 0.0
    %v1771 = vmax.f32 %v1755, 0.0
    %v1772 = vmax.f32 %v1756, 0.0
    %v1773 = vmax.f32 %v1757, 0.0
    %v1774 = vmax.f32 %v1758, 0.0
    %v1775 = vmax.f32 %v1759, 0.0
    %v1776 = vand.u32 2147483647, %v1744
    %v1777 = vand.u32 2147483647, %v1745
    %v1778 = vand.u32 2147483647, %v1746
    %v1779 = vand.u32 2147483647, %v1747
    %v1780 = vand.u32 2147483647, %v1748
    %v1781 = vand.u32 2147483647, %v1749
    %v1782 = vand.u32 2147483647, %v1750
    %v1783 = vand.u32 2147483647, %v1751
    %v1784 = vand.u32 2147483647, %v1752
    %v1785 = vand.u32 2147483647, %v1753
    %v1786 = vand.u32 2147483647, %v1754
    %v1787 = vand.u32 2147483647, %v1755
    %v1788 = vand.u32 2147483647, %v1756
    %v1789 = vand.u32 2147483647, %v1757
    %v1790 = vand.u32 2147483647, %v1758
    %v1791 = vand.u32 2147483647, %v1759
    %v1792 = vsub.f32 0.0, %v1776
    %v1793 = vsub.f32 0.0, %v1777
    %v1794 = vsub.f32 0.0, %v1778
    %v1795 = vsub.f32 0.0, %v1779
    %v1796 = vsub.f32 0.0, %v1780
    %v1797 = vsub.f32 0.0, %v1781
    %v1798 = vsub.f32 0.0, %v1782
    %v1799 = vsub.f32 0.0, %v1783
    %v1800 = vsub.f32 0.0, %v1784
    %v1801 = vsub.f32 0.0, %v1785
    %v1802 = vsub.f32 0.0, %v1786
    %v1803 = vsub.f32 0.0, %v1787
    %v1804 = vsub.f32 0.0, %v1788
    %v1805 = vsub.f32 0.0, %v1789
    %v1806 = vsub.f32 0.0, %v1790
    %v1807 = vsub.f32 0.0, %v1791
    %v1808 = vmul.f32 %v1792, 1.442695
    %v1809 = vpow.pop %v1808
    %v1810 = vmul.f32 %v1793, 1.442695
    %v1811 = vpow.pop %v1810
    %v1812 = vmul.f32 %v1794, 1.442695
    %v1813 = vpow.pop %v1812
    %v1814 = vmul.f32 %v1795, 1.442695
    %v1815 = vpow.pop %v1814
    %v1816 = vmul.f32 %v1796, 1.442695
    %v1817 = vpow.pop %v1816
    %v1818 = vmul.f32 %v1797, 1.442695
    %v1819 = vpow.pop %v1818
    %v1820 = vmul.f32 %v1798, 1.442695
    %v1821 = vpow.pop %v1820
    %v1822 = vmul.f32 %v1799, 1.442695
    %v1823 = vpow.pop %v1822
    %v1824 = vmul.f32 %v1800, 1.442695
    %v1825 = vpow.pop %v1824
    %v1826 = vmul.f32 %v1801, 1.442695
    %v1827 = vpow.pop %v1826
    %v1828 = vmul.f32 %v1802, 1.442695
    %v1829 = vpow.pop %v1828
    %v1830 = vmul.f32 %v1803, 1.442695
    %v1831 = vpow.pop %v1830
    %v1832 = vmul.f32 %v1804, 1.442695
    %v1833 = vpow.pop %v1832
    %v1834 = vmul.f32 %v1805, 1.442695
    %v1835 = vpow.pop %v1834
    %v1836 = vmul.f32 %v1806, 1.442695
    %v1837 = vpow.pop %v1836
    %v1838 = vmul.f32 %v1807, 1.442695
    %v1839 = vpow.pop %v1838
    %v1840 = vadd.f32 %v1809, 1.0
    %v1841 = vlog2.pop %v1840
    %v1842 = vmul.f32 %v1841, 0.6931472
    %v1843 = vmul.f32 -0.5, %v1809
    %v1844 = vadd.f32 %v1843, 1.0
    %v1845 = vmul.f32 %v1844, %v1809
    %v1846 = vand.u32 2147483647, %v1809
    %vm1847 = vcmp.lt.f32.partialorder %v1846, 0.0004427343
    %v1848 = vsel %vm1847, %v1845, %v1842
    %v1849 = vadd.f32 %v1811, 1.0
    %v1850 = vlog2.pop %v1849
    %v1851 = vmul.f32 %v1850, 0.6931472
    %v1852 = vmul.f32 -0.5, %v1811
    %v1853 = vadd.f32 %v1852, 1.0
    %v1854 = vmul.f32 %v1853, %v1811
    %v1855 = vand.u32 2147483647, %v1811
    %vm1856 = vcmp.lt.f32.partialorder %v1855, 0.0004427343
    %v1857 = vsel %vm1856, %v1854, %v1851
    %v1858 = vadd.f32 %v1813, 1.0
    %v1859 = vlog2.pop %v1858
    %v1860 = vmul.f32 %v1859, 0.6931472
    %v1861 = vmul.f32 -0.5, %v1813
    %v1862 = vadd.f32 %v1861, 1.0
    %v1863 = vmul.f32 %v1862, %v1813
    %v1864 = vand.u32 2147483647, %v1813
    %vm1865 = vcmp.lt.f32.partialorder %v1864, 0.0004427343
    %v1866 = vsel %vm1865, %v1863, %v1860
    %v1867 = vadd.f32 %v1815, 1.0
    %v1868 = vlog2.pop %v1867
    %v1869 = vmul.f32 %v1868, 0.6931472
    %v1870 = vmul.f32 -0.5, %v1815
    %v1871 = vadd.f32 %v1870, 1.0
    %v1872 = vmul.f32 %v1871, %v1815
    %v1873 = vand.u32 2147483647, %v1815
    %vm1874 = vcmp.lt.f32.partialorder %v1873, 0.0004427343
    %v1875 = vsel %vm1874, %v1872, %v1869
    %v1876 = vadd.f32 %v1817, 1.0
    %v1877 = vlog2.pop %v1876
    %v1878 = vmul.f32 %v1877, 0.6931472
    %v1879 = vmul.f32 -0.5, %v1817
    %v1880 = vadd.f32 %v1879, 1.0
    %v1881 = vmul.f32 %v1880, %v1817
    %v1882 = vand.u32 2147483647, %v1817
    %vm1883 = vcmp.lt.f32.partialorder %v1882, 0.0004427343
    %v1884 = vsel %vm1883, %v1881, %v1878
    %v1885 = vadd.f32 %v1819, 1.0
    %v1886 = vlog2.pop %v1885
    %v1887 = vmul.f32 %v1886, 0.6931472
    %v1888 = vmul.f32 -0.5, %v1819
    %v1889 = vadd.f32 %v1888, 1.0
    %v1890 = vmul.f32 %v1889, %v1819
    %v1891 = vand.u32 2147483647, %v1819
    %vm1892 = vcmp.lt.f32.partialorder %v1891, 0.0004427343
    %v1893 = vsel %vm1892, %v1890, %v1887
    %v1894 = vadd.f32 %v1821, 1.0
    %v1895 = vlog2.pop %v1894
    %v1896 = vmul.f32 %v1895, 0.6931472
    %v1897 = vmul.f32 -0.5, %v1821
    %v1898 = vadd.f32 %v1897, 1.0
    %v1899 = vmul.f32 %v1898, %v1821
    %v1900 = vand.u32 2147483647, %v1821
    %vm1901 = vcmp.lt.f32.partialorder %v1900, 0.0004427343
    %v1902 = vsel %vm1901, %v1899, %v1896
    %v1903 = vadd.f32 %v1823, 1.0
    %v1904 = vlog2.pop %v1903
    %v1905 = vmul.f32 %v1904, 0.6931472
    %v1906 = vmul.f32 -0.5, %v1823
    %v1907 = vadd.f32 %v1906, 1.0
    %v1908 = vmul.f32 %v1907, %v1823
    %v1909 = vand.u32 2147483647, %v1823
    %vm1910 = vcmp.lt.f32.partialorder %v1909, 0.0004427343
    %v1911 = vsel %vm1910, %v1908, %v1905
    %v1912 = vadd.f32 %v1825, 1.0
    %v1913 = vlog2.pop %v1912
    %v1914 = vmul.f32 %v1913, 0.6931472
    %v1915 = vmul.f32 -0.5, %v1825
    %v1916 = vadd.f32 %v1915, 1.0
    %v1917 = vmul.f32 %v1916, %v1825
    %v1918 = vand.u32 2147483647, %v1825
    %vm1919 = vcmp.lt.f32.partialorder %v1918, 0.0004427343
    %v1920 = vsel %vm1919, %v1917, %v1914
    %v1921 = vadd.f32 %v1827, 1.0
    %v1922 = vlog2.pop %v1921
    %v1923 = vmul.f32 %v1922, 0.6931472
    %v1924 = vmul.f32 -0.5, %v1827
    %v1925 = vadd.f32 %v1924, 1.0
    %v1926 = vmul.f32 %v1925, %v1827
    %v1927 = vand.u32 2147483647, %v1827
    %vm1928 = vcmp.lt.f32.partialorder %v1927, 0.0004427343
    %v1929 = vsel %vm1928, %v1926, %v1923
    %v1930 = vadd.f32 %v1829, 1.0
    %v1931 = vlog2.pop %v1930
    %v1932 = vmul.f32 %v1931, 0.6931472
    %v1933 = vmul.f32 -0.5, %v1829
    %v1934 = vadd.f32 %v1933, 1.0
    %v1935 = vmul.f32 %v1934, %v1829
    %v1936 = vand.u32 2147483647, %v1829
    %vm1937 = vcmp.lt.f32.partialorder %v1936, 0.0004427343
    %v1938 = vsel %vm1937, %v1935, %v1932
    %v1939 = vadd.f32 %v1831, 1.0
    %v1940 = vlog2.pop %v1939
    %v1941 = vmul.f32 %v1940, 0.6931472
    %v1942 = vmul.f32 -0.5, %v1831
    %v1943 = vadd.f32 %v1942, 1.0
    %v1944 = vmul.f32 %v1943, %v1831
    %v1945 = vand.u32 2147483647, %v1831
    %vm1946 = vcmp.lt.f32.partialorder %v1945, 0.0004427343
    %v1947 = vsel %vm1946, %v1944, %v1941
    %v1948 = vadd.f32 %v1833, 1.0
    %v1949 = vlog2.pop %v1948
    %v1950 = vmul.f32 %v1949, 0.6931472
    %v1951 = vmul.f32 -0.5, %v1833
    %v1952 = vadd.f32 %v1951, 1.0
    %v1953 = vmul.f32 %v1952, %v1833
    %v1954 = vand.u32 2147483647, %v1833
    %vm1955 = vcmp.lt.f32.partialorder %v1954, 0.0004427343
    %v1956 = vsel %vm1955, %v1953, %v1950
    %v1957 = vadd.f32 %v1835, 1.0
    %v1958 = vlog2.pop %v1957
    %v1959 = vmul.f32 %v1958, 0.6931472
    %v1960 = vmul.f32 -0.5, %v1835
    %v1961 = vadd.f32 %v1960, 1.0
    %v1962 = vmul.f32 %v1961, %v1835
    %v1963 = vand.u32 2147483647, %v1835
    %vm1964 = vcmp.lt.f32.partialorder %v1963, 0.0004427343
    %v1965 = vsel %vm1964, %v1962, %v1959
    %v1966 = vadd.f32 %v1837, 1.0
    %v1967 = vlog2.pop %v1966
    %v1968 = vmul.f32 %v1967, 0.6931472
    %v1969 = vmul.f32 -0.5, %v1837
    %v1970 = vadd.f32 %v1969, 1.0
    %v1971 = vmul.f32 %v1970, %v1837
    %v1972 = vand.u32 2147483647, %v1837
    %vm1973 = vcmp.lt.f32.partialorder %v1972, 0.0004427343
    %v1974 = vsel %vm1973, %v1971, %v1968
    %v1975 = vadd.f32 %v1839, 1.0
    %v1976 = vlog2.pop %v1975
    %v1977 = vmul.f32 %v1976, 0.6931472
    %v1978 = vmul.f32 -0.5, %v1839
    %v1979 = vadd.f32 %v1978, 1.0
    %v1980 = vmul.f32 %v1979, %v1839
    %v1981 = vand.u32 2147483647, %v1839
    %vm1982 = vcmp.lt.f32.partialorder %v1981, 0.0004427343
    %v1983 = vsel %vm1982, %v1980, %v1977
    %v1984 = vadd.f32 %v1760, %v1848
    %v1985 = vadd.f32 %v1761, %v1857
    %v1986 = vadd.f32 %v1762, %v1866
    %v1987 = vadd.f32 %v1763, %v1875
    %v1988 = vadd.f32 %v1764, %v1884
    %v1989 = vadd.f32 %v1765, %v1893
    %v1990 = vadd.f32 %v1766, %v1902
    %v1991 = vadd.f32 %v1767, %v1911
    %v1992 = vadd.f32 %v1768, %v1920
    %v1993 = vadd.f32 %v1769, %v1929
    %v1994 = vadd.f32 %v1770, %v1938
    %v1995 = vadd.f32 %v1771, %v1947
    %v1996 = vadd.f32 %v1772, %v1956
    %v1997 = vadd.f32 %v1773, %v1965
    %v1998 = vadd.f32 %v1774, %v1974
    %v1999 = vadd.f32 %v1775, %v1983
    %v2000 = vld [vmem:[%s11] sm:$0xf]
    %v2001 = vld [vmem:[%s11 + $0x4] sm:$0xf]
    %v2002 = vld [vmem:[%s11 + $0x8] sm:$0xf]
    %v2003 = vld [vmem:[%s11 + $0xc] sm:$0xf]
    %v2004 = vpack.c.bf16 %v1988, %v1984
    %v2005 = vpack.c.bf16 %v1989, %v1985
    %v2006 = vpack.c.bf16 %v1990, %v1986
    %v2007 = vpack.c.bf16 %v1991, %v1987
    %v2008 = vpack.c.bf16 %v1996, %v1992
    %v2009 = vpack.c.bf16 %v1997, %v1993
    %v2010 = vpack.c.bf16 %v1998, %v1994
    %v2011 = vpack.c.bf16 %v1999, %v1995
    %v2012 = vld [vmem:[%s12] sm:$0xff]
    %v2013 = vld [vmem:[%s12 + $0x8] sm:$0xff]
    %v2014 = vld [vmem:[%s12 + $0x10] sm:$0xff]
    %v2015 = vld [vmem:[%s12 + $0x18] sm:$0xff]
    %2017 = vset.pattern.permute.xlu0 0
    %2018 = vperm.xlu0 %2017, %v2012
    %v2019 = vpop.permute.xlu0 %2018
    %2022 = vset.pattern.permute.xlu0 0
    %2023 = vperm.xlu0 %2022, %v2013
    %v2024 = vpop.permute.xlu0 %2023
    %2027 = vset.pattern.permute.xlu0 0
    %2028 = vperm.xlu0 %2027, %v2014
    %v2029 = vpop.permute.xlu0 %2028
    %2032 = vset.pattern.permute.xlu0 0
    %2033 = vperm.xlu0 %2032, %v2015
    %v2034 = vpop.permute.xlu0 %2033
    %v2040 = vunpack.c.l.b16 %v2000
    %v2041 = vunpack.c.l.b16 %v2001
    %v2042 = vunpack.c.l.b16 %v2002
    %v2043 = vunpack.c.l.b16 %v2003
    %v2044 = vpack.c.b16 %v2041, %v2040
    %v2045 = vpack.c.b16 %v2043, %v2042
    %v2047 = vsel %vm471, %v2044, 0
    %v2050 = vsel %vm471, %v2045, 0
    %2052 = vmatpush.bf16.msra.mxu0 0
    %2053 = vmatpush.bf16.msra.mxu0 0
    %2054 = vmatpush.bf16.msra.mxu0 0
    %2055 = vmatpush.bf16.msra.mxu0 0
    %2056 = vmatpush.bf16.msra.mxu0 0
    %2057 = vmatpush.bf16.msra.mxu0 0
    %2058 = vmatpush.bf16.msra.mxu0 %v2008
    %2059 = vmatpush.bf16.msra.mxu0 %v2004
    %2060 = vmatmul.bf16.gmra.mxu0 %v2047
    %v2061 = vpop.f32.mrf.mxu0
    %v2062 = vadd.f32 %v2019, %v2061
    %v2063 = vpop.f32.mrf.mxu0
    %v2064 = vadd.f32 %v2024, %v2063
    %2065 = vmatmul.bf16.gmra.mxu0 %v2050
    %v2066 = vpop.f32.mrf.mxu0
    %v2067 = vadd.f32 %v2029, %v2066
    %v2068 = vpop.f32.mrf.mxu0
    %v2069 = vadd.f32 %v2034, %v2068
    %2070 = vdwg.mxu0
    %2071 = vmatpush.bf16.msra.mxu0 0
    %2072 = vmatpush.bf16.msra.mxu0 0
    %2073 = vmatpush.bf16.msra.mxu0 0
    %2074 = vmatpush.bf16.msra.mxu0 0
    %2075 = vmatpush.bf16.msra.mxu0 0
    %2076 = vmatpush.bf16.msra.mxu0 0
    %2077 = vmatpush.bf16.msra.mxu0 %v2009
    %2078 = vmatpush.bf16.msra.mxu0 %v2005
    %2079 = vmatmul.bf16.gmra.mxu0 %v2047
    %v2080 = vpop.f32.mrf.mxu0
    %v2081 = vadd.f32 %v2019, %v2080
    %v2082 = vpop.f32.mrf.mxu0
    %v2083 = vadd.f32 %v2024, %v2082
    %2084 = vmatmul.bf16.gmra.mxu0 %v2050
    %v2085 = vpop.f32.mrf.mxu0
    %v2086 = vadd.f32 %v2029, %v2085
    %v2087 = vpop.f32.mrf.mxu0
    %v2088 = vadd.f32 %v2034, %v2087
    %2089 = vdwg.mxu0
    %2090 = vmatpush.bf16.msra.mxu0 0
    %2091 = vmatpush.bf16.msra.mxu0 0
    %2092 = vmatpush.bf16.msra.mxu0 0
    %2093 = vmatpush.bf16.msra.mxu0 0
    %2094 = vmatpush.bf16.msra.mxu0 0
    %2095 = vmatpush.bf16.msra.mxu0 0
    %2096 = vmatpush.bf16.msra.mxu0 %v2010
    %2097 = vmatpush.bf16.msra.mxu0 %v2006
    %2098 = vmatmul.bf16.gmra.mxu0 %v2047
    %v2099 = vpop.f32.mrf.mxu0
    %v2100 = vadd.f32 %v2019, %v2099
    %v2101 = vpop.f32.mrf.mxu0
    %v2102 = vadd.f32 %v2024, %v2101
    %2103 = vmatmul.bf16.gmra.mxu0 %v2050
    %v2104 = vpop.f32.mrf.mxu0
    %v2105 = vadd.f32 %v2029, %v2104
    %v2106 = vpop.f32.mrf.mxu0
    %v2107 = vadd.f32 %v2034, %v2106
    %2108 = vdwg.mxu0
    %2109 = vmatpush.bf16.msra.mxu0 0
    %2110 = vmatpush.bf16.msra.mxu0 0
    %2111 = vmatpush.bf16.msra.mxu0 0
    %2112 = vmatpush.bf16.msra.mxu0 0
    %2113 = vmatpush.bf16.msra.mxu0 0
    %2114 = vmatpush.bf16.msra.mxu0 0
    %2115 = vmatpush.bf16.msra.mxu0 %v2011
    %2116 = vmatpush.bf16.msra.mxu0 %v2007
    %2117 = vmatmul.bf16.gmra.mxu0 %v2047
    %v2118 = vpop.f32.mrf.mxu0
    %v2119 = vadd.f32 %v2019, %v2118
    %v2120 = vpop.f32.mrf.mxu0
    %v2121 = vadd.f32 %v2024, %v2120
    %2122 = vmatmul.bf16.gmra.mxu0 %v2050
    %v2123 = vpop.f32.mrf.mxu0
    %v2124 = vadd.f32 %v2029, %v2123
    %v2125 = vpop.f32.mrf.mxu0
    %v2126 = vadd.f32 %v2034, %v2125
    %2127 = vdwg.mxu0
    %v2128 = vmax.f32 %v2062, 0.0
    %v2129 = vmax.f32 %v2081, 0.0
    %v2130 = vmax.f32 %v2100, 0.0
    %v2131 = vmax.f32 %v2119, 0.0
    %v2132 = vmax.f32 %v2064, 0.0
    %v2133 = vmax.f32 %v2083, 0.0
    %v2134 = vmax.f32 %v2102, 0.0
    %v2135 = vmax.f32 %v2121, 0.0
    %v2136 = vmax.f32 %v2067, 0.0
    %v2137 = vmax.f32 %v2086, 0.0
    %v2138 = vmax.f32 %v2105, 0.0
    %v2139 = vmax.f32 %v2124, 0.0
    %v2140 = vmax.f32 %v2069, 0.0
    %v2141 = vmax.f32 %v2088, 0.0
    %v2142 = vmax.f32 %v2107, 0.0
    %v2143 = vmax.f32 %v2126, 0.0
    %v2144 = vand.u32 2147483647, %v2062
    %v2145 = vand.u32 2147483647, %v2081
    %v2146 = vand.u32 2147483647, %v2100
    %v2147 = vand.u32 2147483647, %v2119
    %v2148 = vand.u32 2147483647, %v2064
    %v2149 = vand.u32 2147483647, %v2083
    %v2150 = vand.u32 2147483647, %v2102
    %v2151 = vand.u32 2147483647, %v2121
    %v2152 = vand.u32 2147483647, %v2067
    %v2153 = vand.u32 2147483647, %v2086
    %v2154 = vand.u32 2147483647, %v2105
    %v2155 = vand.u32 2147483647, %v2124
    %v2156 = vand.u32 2147483647, %v2069
    %v2157 = vand.u32 2147483647, %v2088
    %v2158 = vand.u32 2147483647, %v2107
    %v2159 = vand.u32 2147483647, %v2126
    %v2160 = vsub.f32 0.0, %v2144
    %v2161 = vsub.f32 0.0, %v2145
    %v2162 = vsub.f32 0.0, %v2146
    %v2163 = vsub.f32 0.0, %v2147
    %v2164 = vsub.f32 0.0, %v2148
    %v2165 = vsub.f32 0.0, %v2149
    %v2166 = vsub.f32 0.0, %v2150
    %v2167 = vsub.f32 0.0, %v2151
    %v2168 = vsub.f32 0.0, %v2152
    %v2169 = vsub.f32 0.0, %v2153
    %v2170 = vsub.f32 0.0, %v2154
    %v2171 = vsub.f32 0.0, %v2155
    %v2172 = vsub.f32 0.0, %v2156
    %v2173 = vsub.f32 0.0, %v2157
    %v2174 = vsub.f32 0.0, %v2158
    %v2175 = vsub.f32 0.0, %v2159
    %v2176 = vmul.f32 %v2160, 1.442695
    %v2177 = vpow.pop %v2176
    %v2178 = vmul.f32 %v2161, 1.442695
    %v2179 = vpow.pop %v2178
    %v2180 = vmul.f32 %v2162, 1.442695
    %v2181 = vpow.pop %v2180
    %v2182 = vmul.f32 %v2163, 1.442695
    %v2183 = vpow.pop %v2182
    %v2184 = vmul.f32 %v2164, 1.442695
    %v2185 = vpow.pop %v2184
    %v2186 = vmul.f32 %v2165, 1.442695
    %v2187 = vpow.pop %v2186
    %v2188 = vmul.f32 %v2166, 1.442695
    %v2189 = vpow.pop %v2188
    %v2190 = vmul.f32 %v2167, 1.442695
    %v2191 = vpow.pop %v2190
    %v2192 = vmul.f32 %v2168, 1.442695
    %v2193 = vpow.pop %v2192
    %v2194 = vmul.f32 %v2169, 1.442695
    %v2195 = vpow.pop %v2194
    %v2196 = vmul.f32 %v2170, 1.442695
    %v2197 = vpow.pop %v2196
    %v2198 = vmul.f32 %v2171, 1.442695
    %v2199 = vpow.pop %v2198
    %v2200 = vmul.f32 %v2172, 1.442695
    %v2201 = vpow.pop %v2200
    %v2202 = vmul.f32 %v2173, 1.442695
    %v2203 = vpow.pop %v2202
    %v2204 = vmul.f32 %v2174, 1.442695
    %v2205 = vpow.pop %v2204
    %v2206 = vmul.f32 %v2175, 1.442695
    %v2207 = vpow.pop %v2206
    %v2208 = vadd.f32 %v2177, 1.0
    %v2209 = vlog2.pop %v2208
    %v2210 = vmul.f32 %v2209, 0.6931472
    %v2211 = vmul.f32 -0.5, %v2177
    %v2212 = vadd.f32 %v2211, 1.0
    %v2213 = vmul.f32 %v2212, %v2177
    %v2214 = vand.u32 2147483647, %v2177
    %vm2215 = vcmp.lt.f32.partialorder %v2214, 0.0004427343
    %v2216 = vsel %vm2215, %v2213, %v2210
    %v2217 = vadd.f32 %v2179, 1.0
    %v2218 = vlog2.pop %v2217
    %v2219 = vmul.f32 %v2218, 0.6931472
    %v2220 = vmul.f32 -0.5, %v2179
    %v2221 = vadd.f32 %v2220, 1.0
    %v2222 = vmul.f32 %v2221, %v2179
    %v2223 = vand.u32 2147483647, %v2179
    %vm2224 = vcmp.lt.f32.partialorder %v2223, 0.0004427343
    %v2225 = vsel %vm2224, %v2222, %v2219
    %v2226 = vadd.f32 %v2181, 1.0
    %v2227 = vlog2.pop %v2226
    %v2228 = vmul.f32 %v2227, 0.6931472
    %v2229 = vmul.f32 -0.5, %v2181
    %v2230 = vadd.f32 %v2229, 1.0
    %v2231 = vmul.f32 %v2230, %v2181
    %v2232 = vand.u32 2147483647, %v2181
    %vm2233 = vcmp.lt.f32.partialorder %v2232, 0.0004427343
    %v2234 = vsel %vm2233, %v2231, %v2228
    %v2235 = vadd.f32 %v2183, 1.0
    %v2236 = vlog2.pop %v2235
    %v2237 = vmul.f32 %v2236, 0.6931472
    %v2238 = vmul.f32 -0.5, %v2183
    %v2239 = vadd.f32 %v2238, 1.0
    %v2240 = vmul.f32 %v2239, %v2183
    %v2241 = vand.u32 2147483647, %v2183
    %vm2242 = vcmp.lt.f32.partialorder %v2241, 0.0004427343
    %v2243 = vsel %vm2242, %v2240, %v2237
    %v2244 = vadd.f32 %v2185, 1.0
    %v2245 = vlog2.pop %v2244
    %v2246 = vmul.f32 %v2245, 0.6931472
    %v2247 = vmul.f32 -0.5, %v2185
    %v2248 = vadd.f32 %v2247, 1.0
    %v2249 = vmul.f32 %v2248, %v2185
    %v2250 = vand.u32 2147483647, %v2185
    %vm2251 = vcmp.lt.f32.partialorder %v2250, 0.0004427343
    %v2252 = vsel %vm2251, %v2249, %v2246
    %v2253 = vadd.f32 %v2187, 1.0
    %v2254 = vlog2.pop %v2253
    %v2255 = vmul.f32 %v2254, 0.6931472
    %v2256 = vmul.f32 -0.5, %v2187
    %v2257 = vadd.f32 %v2256, 1.0
    %v2258 = vmul.f32 %v2257, %v2187
    %v2259 = vand.u32 2147483647, %v2187
    %vm2260 = vcmp.lt.f32.partialorder %v2259, 0.0004427343
    %v2261 = vsel %vm2260, %v2258, %v2255
    %v2262 = vadd.f32 %v2189, 1.0
    %v2263 = vlog2.pop %v2262
    %v2264 = vmul.f32 %v2263, 0.6931472
    %v2265 = vmul.f32 -0.5, %v2189
    %v2266 = vadd.f32 %v2265, 1.0
    %v2267 = vmul.f32 %v2266, %v2189
    %v2268 = vand.u32 2147483647, %v2189
    %vm2269 = vcmp.lt.f32.partialorder %v2268, 0.0004427343
    %v2270 = vsel %vm2269, %v2267, %v2264
    %v2271 = vadd.f32 %v2191, 1.0
    %v2272 = vlog2.pop %v2271
    %v2273 = vmul.f32 %v2272, 0.6931472
    %v2274 = vmul.f32 -0.5, %v2191
    %v2275 = vadd.f32 %v2274, 1.0
    %v2276 = vmul.f32 %v2275, %v2191
    %v2277 = vand.u32 2147483647, %v2191
    %vm2278 = vcmp.lt.f32.partialorder %v2277, 0.0004427343
    %v2279 = vsel %vm2278, %v2276, %v2273
    %v2280 = vadd.f32 %v2193, 1.0
    %v2281 = vlog2.pop %v2280
    %v2282 = vmul.f32 %v2281, 0.6931472
    %v2283 = vmul.f32 -0.5, %v2193
    %v2284 = vadd.f32 %v2283, 1.0
    %v2285 = vmul.f32 %v2284, %v2193
    %v2286 = vand.u32 2147483647, %v2193
    %vm2287 = vcmp.lt.f32.partialorder %v2286, 0.0004427343
    %v2288 = vsel %vm2287, %v2285, %v2282
    %v2289 = vadd.f32 %v2195, 1.0
    %v2290 = vlog2.pop %v2289
    %v2291 = vmul.f32 %v2290, 0.6931472
    %v2292 = vmul.f32 -0.5, %v2195
    %v2293 = vadd.f32 %v2292, 1.0
    %v2294 = vmul.f32 %v2293, %v2195
    %v2295 = vand.u32 2147483647, %v2195
    %vm2296 = vcmp.lt.f32.partialorder %v2295, 0.0004427343
    %v2297 = vsel %vm2296, %v2294, %v2291
    %v2298 = vadd.f32 %v2197, 1.0
    %v2299 = vlog2.pop %v2298
    %v2300 = vmul.f32 %v2299, 0.6931472
    %v2301 = vmul.f32 -0.5, %v2197
    %v2302 = vadd.f32 %v2301, 1.0
    %v2303 = vmul.f32 %v2302, %v2197
    %v2304 = vand.u32 2147483647, %v2197
    %vm2305 = vcmp.lt.f32.partialorder %v2304, 0.0004427343
    %v2306 = vsel %vm2305, %v2303, %v2300
    %v2307 = vadd.f32 %v2199, 1.0
    %v2308 = vlog2.pop %v2307
    %v2309 = vmul.f32 %v2308, 0.6931472
    %v2310 = vmul.f32 -0.5, %v2199
    %v2311 = vadd.f32 %v2310, 1.0
    %v2312 = vmul.f32 %v2311, %v2199
    %v2313 = vand.u32 2147483647, %v2199
    %vm2314 = vcmp.lt.f32.partialorder %v2313, 0.0004427343
    %v2315 = vsel %vm2314, %v2312, %v2309
    %v2316 = vadd.f32 %v2201, 1.0
    %v2317 = vlog2.pop %v2316
    %v2318 = vmul.f32 %v2317, 0.6931472
    %v2319 = vmul.f32 -0.5, %v2201
    %v2320 = vadd.f32 %v2319, 1.0
    %v2321 = vmul.f32 %v2320, %v2201
    %v2322 = vand.u32 2147483647, %v2201
    %vm2323 = vcmp.lt.f32.partialorder %v2322, 0.0004427343
    %v2324 = vsel %vm2323, %v2321, %v2318
    %v2325 = vadd.f32 %v2203, 1.0
    %v2326 = vlog2.pop %v2325
    %v2327 = vmul.f32 %v2326, 0.6931472
    %v2328 = vmul.f32 -0.5, %v2203
    %v2329 = vadd.f32 %v2328, 1.0
    %v2330 = vmul.f32 %v2329, %v2203
    %v2331 = vand.u32 2147483647, %v2203
    %vm2332 = vcmp.lt.f32.partialorder %v2331, 0.0004427343
    %v2333 = vsel %vm2332, %v2330, %v2327
    %v2334 = vadd.f32 %v2205, 1.0
    %v2335 = vlog2.pop %v2334
    %v2336 = vmul.f32 %v2335, 0.6931472
    %v2337 = vmul.f32 -0.5, %v2205
    %v2338 = vadd.f32 %v2337, 1.0
    %v2339 = vmul.f32 %v2338, %v2205
    %v2340 = vand.u32 2147483647, %v2205
    %vm2341 = vcmp.lt.f32.partialorder %v2340, 0.0004427343
    %v2342 = vsel %vm2341, %v2339, %v2336
    %v2343 = vadd.f32 %v2207, 1.0
    %v2344 = vlog2.pop %v2343
    %v2345 = vmul.f32 %v2344, 0.6931472
    %v2346 = vmul.f32 -0.5, %v2207
    %v2347 = vadd.f32 %v2346, 1.0
    %v2348 = vmul.f32 %v2347, %v2207
    %v2349 = vand.u32 2147483647, %v2207
    %vm2350 = vcmp.lt.f32.partialorder %v2349, 0.0004427343
    %v2351 = vsel %vm2350, %v2348, %v2345
    %v2352 = vadd.f32 %v2128, %v2216
    %v2353 = vadd.f32 %v2129, %v2225
    %v2354 = vadd.f32 %v2130, %v2234
    %v2355 = vadd.f32 %v2131, %v2243
    %v2356 = vadd.f32 %v2132, %v2252
    %v2357 = vadd.f32 %v2133, %v2261
    %v2358 = vadd.f32 %v2134, %v2270
    %v2359 = vadd.f32 %v2135, %v2279
    %v2360 = vadd.f32 %v2136, %v2288
    %v2361 = vadd.f32 %v2137, %v2297
    %v2362 = vadd.f32 %v2138, %v2306
    %v2363 = vadd.f32 %v2139, %v2315
    %v2364 = vadd.f32 %v2140, %v2324
    %v2365 = vadd.f32 %v2141, %v2333
    %v2366 = vadd.f32 %v2142, %v2342
    %v2367 = vadd.f32 %v2143, %v2351
    %v2368 = vld [vmem:[%s13] sm:$0xf]
    %v2369 = vld [vmem:[%s13 + $0x4] sm:$0xf]
    %v2370 = vld [vmem:[%s13 + $0x8] sm:$0xf]
    %v2371 = vld [vmem:[%s13 + $0xc] sm:$0xf]
    %v2372 = vpack.c.bf16 %v2356, %v2352
    %v2373 = vpack.c.bf16 %v2357, %v2353
    %v2374 = vpack.c.bf16 %v2358, %v2354
    %v2375 = vpack.c.bf16 %v2359, %v2355
    %v2376 = vpack.c.bf16 %v2364, %v2360
    %v2377 = vpack.c.bf16 %v2365, %v2361
    %v2378 = vpack.c.bf16 %v2366, %v2362
    %v2379 = vpack.c.bf16 %v2367, %v2363
    %v2380 = vld [vmem:[%s14] sm:$0xff]
    %v2381 = vld [vmem:[%s14 + $0x8] sm:$0xff]
    %v2382 = vld [vmem:[%s14 + $0x10] sm:$0xff]
    %v2383 = vld [vmem:[%s14 + $0x18] sm:$0xff]
    %2385 = vset.pattern.permute.xlu0 0
    %2386 = vperm.xlu0 %2385, %v2380
    %v2387 = vpop.permute.xlu0 %2386
    %2390 = vset.pattern.permute.xlu0 0
    %2391 = vperm.xlu0 %2390, %v2381
    %v2392 = vpop.permute.xlu0 %2391
    %2395 = vset.pattern.permute.xlu0 0
    %2396 = vperm.xlu0 %2395, %v2382
    %v2397 = vpop.permute.xlu0 %2396
    %2400 = vset.pattern.permute.xlu0 0
    %2401 = vperm.xlu0 %2400, %v2383
    %v2402 = vpop.permute.xlu0 %2401
    %v2408 = vunpack.c.l.b16 %v2368
    %v2409 = vunpack.c.l.b16 %v2369
    %v2410 = vunpack.c.l.b16 %v2370
    %v2411 = vunpack.c.l.b16 %v2371
    %v2412 = vpack.c.b16 %v2409, %v2408
    %v2413 = vpack.c.b16 %v2411, %v2410
    %v2415 = vsel %vm471, %v2412, 0
    %v2418 = vsel %vm471, %v2413, 0
    %2420 = vmatpush.bf16.msra.mxu0 0
    %2421 = vmatpush.bf16.msra.mxu0 0
    %2422 = vmatpush.bf16.msra.mxu0 0
    %2423 = vmatpush.bf16.msra.mxu0 0
    %2424 = vmatpush.bf16.msra.mxu0 0
    %2425 = vmatpush.bf16.msra.mxu0 0
    %2426 = vmatpush.bf16.msra.mxu0 %v2376
    %2427 = vmatpush.bf16.msra.mxu0 %v2372
    %2428 = vmatmul.bf16.gmra.mxu0 %v2415
    %v2429 = vpop.f32.mrf.mxu0
    %v2430 = vadd.f32 %v2387, %v2429
    %v2431 = vpop.f32.mrf.mxu0
    %v2432 = vadd.f32 %v2392, %v2431
    %2433 = vmatmul.bf16.gmra.mxu0 %v2418
    %v2434 = vpop.f32.mrf.mxu0
    %v2435 = vadd.f32 %v2397, %v2434
    %v2436 = vpop.f32.mrf.mxu0
    %v2437 = vadd.f32 %v2402, %v2436
    %2438 = vdwg.mxu0
    %2439 = vmatpush.bf16.msra.mxu0 0
    %2440 = vmatpush.bf16.msra.mxu0 0
    %2441 = vmatpush.bf16.msra.mxu0 0
    %2442 = vmatpush.bf16.msra.mxu0 0
    %2443 = vmatpush.bf16.msra.mxu0 0
    %2444 = vmatpush.bf16.msra.mxu0 0
    %2445 = vmatpush.bf16.msra.mxu0 %v2377
    %2446 = vmatpush.bf16.msra.mxu0 %v2373
    %2447 = vmatmul.bf16.gmra.mxu0 %v2415
    %v2448 = vpop.f32.mrf.mxu0
    %v2449 = vadd.f32 %v2387, %v2448
    %v2450 = vpop.f32.mrf.mxu0
    %v2451 = vadd.f32 %v2392, %v2450
    %2452 = vmatmul.bf16.gmra.mxu0 %v2418
    %v2453 = vpop.f32.mrf.mxu0
    %v2454 = vadd.f32 %v2397, %v2453
    %v2455 = vpop.f32.mrf.mxu0
    %v2456 = vadd.f32 %v2402, %v2455
    %2457 = vdwg.mxu0
    %2458 = vmatpush.bf16.msra.mxu0 0
    %2459 = vmatpush.bf16.msra.mxu0 0
    %2460 = vmatpush.bf16.msra.mxu0 0
    %2461 = vmatpush.bf16.msra.mxu0 0
    %2462 = vmatpush.bf16.msra.mxu0 0
    %2463 = vmatpush.bf16.msra.mxu0 0
    %2464 = vmatpush.bf16.msra.mxu0 %v2378
    %2465 = vmatpush.bf16.msra.mxu0 %v2374
    %2466 = vmatmul.bf16.gmra.mxu0 %v2415
    %v2467 = vpop.f32.mrf.mxu0
    %v2468 = vadd.f32 %v2387, %v2467
    %v2469 = vpop.f32.mrf.mxu0
    %v2470 = vadd.f32 %v2392, %v2469
    %2471 = vmatmul.bf16.gmra.mxu0 %v2418
    %v2472 = vpop.f32.mrf.mxu0
    %v2473 = vadd.f32 %v2397, %v2472
    %v2474 = vpop.f32.mrf.mxu0
    %v2475 = vadd.f32 %v2402, %v2474
    %2476 = vdwg.mxu0
    %2477 = vmatpush.bf16.msra.mxu0 0
    %2478 = vmatpush.bf16.msra.mxu0 0
    %2479 = vmatpush.bf16.msra.mxu0 0
    %2480 = vmatpush.bf16.msra.mxu0 0
    %2481 = vmatpush.bf16.msra.mxu0 0
    %2482 = vmatpush.bf16.msra.mxu0 0
    %2483 = vmatpush.bf16.msra.mxu0 %v2379
    %2484 = vmatpush.bf16.msra.mxu0 %v2375
    %2485 = vmatmul.bf16.gmra.mxu0 %v2415
    %v2486 = vpop.f32.mrf.mxu0
    %v2487 = vadd.f32 %v2387, %v2486
    %v2488 = vpop.f32.mrf.mxu0
    %v2489 = vadd.f32 %v2392, %v2488
    %2490 = vmatmul.bf16.gmra.mxu0 %v2418
    %v2491 = vpop.f32.mrf.mxu0
    %v2492 = vadd.f32 %v2397, %v2491
    %v2493 = vpop.f32.mrf.mxu0
    %v2494 = vadd.f32 %v2402, %v2493
    %2495 = vdwg.mxu0
    %v2496 = vmax.f32 %v2430, 0.0
    %v2497 = vmax.f32 %v2449, 0.0
    %v2498 = vmax.f32 %v2468, 0.0
    %v2499 = vmax.f32 %v2487, 0.0
    %v2500 = vmax.f32 %v2432, 0.0
    %v2501 = vmax.f32 %v2451, 0.0
    %v2502 = vmax.f32 %v2470, 0.0
    %v2503 = vmax.f32 %v2489, 0.0
    %v2504 = vmax.f32 %v2435, 0.0
    %v2505 = vmax.f32 %v2454, 0.0
    %v2506 = vmax.f32 %v2473, 0.0
    %v2507 = vmax.f32 %v2492, 0.0
    %v2508 = vmax.f32 %v2437, 0.0
    %v2509 = vmax.f32 %v2456, 0.0
    %v2510 = vmax.f32 %v2475, 0.0
    %v2511 = vmax.f32 %v2494, 0.0
    %v2512 = vand.u32 2147483647, %v2430
    %v2513 = vand.u32 2147483647, %v2449
    %v2514 = vand.u32 2147483647, %v2468
    %v2515 = vand.u32 2147483647, %v2487
    %v2516 = vand.u32 2147483647, %v2432
    %v2517 = vand.u32 2147483647, %v2451
    %v2518 = vand.u32 2147483647, %v2470
    %v2519 = vand.u32 2147483647, %v2489
    %v2520 = vand.u32 2147483647, %v2435
    %v2521 = vand.u32 2147483647, %v2454
    %v2522 = vand.u32 2147483647, %v2473
    %v2523 = vand.u32 2147483647, %v2492
    %v2524 = vand.u32 2147483647, %v2437
    %v2525 = vand.u32 2147483647, %v2456
    %v2526 = vand.u32 2147483647, %v2475
    %v2527 = vand.u32 2147483647, %v2494
    %v2528 = vsub.f32 0.0, %v2512
    %v2529 = vsub.f32 0.0, %v2513
    %v2530 = vsub.f32 0.0, %v2514
    %v2531 = vsub.f32 0.0, %v2515
    %v2532 = vsub.f32 0.0, %v2516
    %v2533 = vsub.f32 0.0, %v2517
    %v2534 = vsub.f32 0.0, %v2518
    %v2535 = vsub.f32 0.0, %v2519
    %v2536 = vsub.f32 0.0, %v2520
    %v2537 = vsub.f32 0.0, %v2521
    %v2538 = vsub.f32 0.0, %v2522
    %v2539 = vsub.f32 0.0, %v2523
    %v2540 = vsub.f32 0.0, %v2524
    %v2541 = vsub.f32 0.0, %v2525
    %v2542 = vsub.f32 0.0, %v2526
    %v2543 = vsub.f32 0.0, %v2527
    %v2544 = vmul.f32 %v2528, 1.442695
    %v2545 = vpow.pop %v2544
    %v2546 = vmul.f32 %v2529, 1.442695
    %v2547 = vpow.pop %v2546
    %v2548 = vmul.f32 %v2530, 1.442695
    %v2549 = vpow.pop %v2548
    %v2550 = vmul.f32 %v2531, 1.442695
    %v2551 = vpow.pop %v2550
    %v2552 = vmul.f32 %v2532, 1.442695
    %v2553 = vpow.pop %v2552
    %v2554 = vmul.f32 %v2533, 1.442695
    %v2555 = vpow.pop %v2554
    %v2556 = vmul.f32 %v2534, 1.442695
    %v2557 = vpow.pop %v2556
    %v2558 = vmul.f32 %v2535, 1.442695
    %v2559 = vpow.pop %v2558
    %v2560 = vmul.f32 %v2536, 1.442695
    %v2561 = vpow.pop %v2560
    %v2562 = vmul.f32 %v2537, 1.442695
    %v2563 = vpow.pop %v2562
    %v2564 = vmul.f32 %v2538, 1.442695
    %v2565 = vpow.pop %v2564
    %v2566 = vmul.f32 %v2539, 1.442695
    %v2567 = vpow.pop %v2566
    %v2568 = vmul.f32 %v2540, 1.442695
    %v2569 = vpow.pop %v2568
    %v2570 = vmul.f32 %v2541, 1.442695
    %v2571 = vpow.pop %v2570
    %v2572 = vmul.f32 %v2542, 1.442695
    %v2573 = vpow.pop %v2572
    %v2574 = vmul.f32 %v2543, 1.442695
    %v2575 = vpow.pop %v2574
    %v2576 = vadd.f32 %v2545, 1.0
    %v2577 = vlog2.pop %v2576
    %v2578 = vmul.f32 %v2577, 0.6931472
    %v2579 = vmul.f32 -0.5, %v2545
    %v2580 = vadd.f32 %v2579, 1.0
    %v2581 = vmul.f32 %v2580, %v2545
    %v2582 = vand.u32 2147483647, %v2545
    %vm2583 = vcmp.lt.f32.partialorder %v2582, 0.0004427343
    %v2584 = vsel %vm2583, %v2581, %v2578
    %v2585 = vadd.f32 %v2547, 1.0
    %v2586 = vlog2.pop %v2585
    %v2587 = vmul.f32 %v2586, 0.6931472
    %v2588 = vmul.f32 -0.5, %v2547
    %v2589 = vadd.f32 %v2588, 1.0
    %v2590 = vmul.f32 %v2589, %v2547
    %v2591 = vand.u32 2147483647, %v2547
    %vm2592 = vcmp.lt.f32.partialorder %v2591, 0.0004427343
    %v2593 = vsel %vm2592, %v2590, %v2587
    %v2594 = vadd.f32 %v2549, 1.0
    %v2595 = vlog2.pop %v2594
    %v2596 = vmul.f32 %v2595, 0.6931472
    %v2597 = vmul.f32 -0.5, %v2549
    %v2598 = vadd.f32 %v2597, 1.0
    %v2599 = vmul.f32 %v2598, %v2549
    %v2600 = vand.u32 2147483647, %v2549
    %vm2601 = vcmp.lt.f32.partialorder %v2600, 0.0004427343
    %v2602 = vsel %vm2601, %v2599, %v2596
    %v2603 = vadd.f32 %v2551, 1.0
    %v2604 = vlog2.pop %v2603
    %v2605 = vmul.f32 %v2604, 0.6931472
    %v2606 = vmul.f32 -0.5, %v2551
    %v2607 = vadd.f32 %v2606, 1.0
    %v2608 = vmul.f32 %v2607, %v2551
    %v2609 = vand.u32 2147483647, %v2551
    %vm2610 = vcmp.lt.f32.partialorder %v2609, 0.0004427343
    %v2611 = vsel %vm2610, %v2608, %v2605
    %v2612 = vadd.f32 %v2553, 1.0
    %v2613 = vlog2.pop %v2612
    %v2614 = vmul.f32 %v2613, 0.6931472
    %v2615 = vmul.f32 -0.5, %v2553
    %v2616 = vadd.f32 %v2615, 1.0
    %v2617 = vmul.f32 %v2616, %v2553
    %v2618 = vand.u32 2147483647, %v2553
    %vm2619 = vcmp.lt.f32.partialorder %v2618, 0.0004427343
    %v2620 = vsel %vm2619, %v2617, %v2614
    %v2621 = vadd.f32 %v2555, 1.0
    %v2622 = vlog2.pop %v2621
    %v2623 = vmul.f32 %v2622, 0.6931472
    %v2624 = vmul.f32 -0.5, %v2555
    %v2625 = vadd.f32 %v2624, 1.0
    %v2626 = vmul.f32 %v2625, %v2555
    %v2627 = vand.u32 2147483647, %v2555
    %vm2628 = vcmp.lt.f32.partialorder %v2627, 0.0004427343
    %v2629 = vsel %vm2628, %v2626, %v2623
    %v2630 = vadd.f32 %v2557, 1.0
    %v2631 = vlog2.pop %v2630
    %v2632 = vmul.f32 %v2631, 0.6931472
    %v2633 = vmul.f32 -0.5, %v2557
    %v2634 = vadd.f32 %v2633, 1.0
    %v2635 = vmul.f32 %v2634, %v2557
    %v2636 = vand.u32 2147483647, %v2557
    %vm2637 = vcmp.lt.f32.partialorder %v2636, 0.0004427343
    %v2638 = vsel %vm2637, %v2635, %v2632
    %v2639 = vadd.f32 %v2559, 1.0
    %v2640 = vlog2.pop %v2639
    %v2641 = vmul.f32 %v2640, 0.6931472
    %v2642 = vmul.f32 -0.5, %v2559
    %v2643 = vadd.f32 %v2642, 1.0
    %v2644 = vmul.f32 %v2643, %v2559
    %v2645 = vand.u32 2147483647, %v2559
    %vm2646 = vcmp.lt.f32.partialorder %v2645, 0.0004427343
    %v2647 = vsel %vm2646, %v2644, %v2641
    %v2648 = vadd.f32 %v2561, 1.0
    %v2649 = vlog2.pop %v2648
    %v2650 = vmul.f32 %v2649, 0.6931472
    %v2651 = vmul.f32 -0.5, %v2561
    %v2652 = vadd.f32 %v2651, 1.0
    %v2653 = vmul.f32 %v2652, %v2561
    %v2654 = vand.u32 2147483647, %v2561
    %vm2655 = vcmp.lt.f32.partialorder %v2654, 0.0004427343
    %v2656 = vsel %vm2655, %v2653, %v2650
    %v2657 = vadd.f32 %v2563, 1.0
    %v2658 = vlog2.pop %v2657
    %v2659 = vmul.f32 %v2658, 0.6931472
    %v2660 = vmul.f32 -0.5, %v2563
    %v2661 = vadd.f32 %v2660, 1.0
    %v2662 = vmul.f32 %v2661, %v2563
    %v2663 = vand.u32 2147483647, %v2563
    %vm2664 = vcmp.lt.f32.partialorder %v2663, 0.0004427343
    %v2665 = vsel %vm2664, %v2662, %v2659
    %v2666 = vadd.f32 %v2565, 1.0
    %v2667 = vlog2.pop %v2666
    %v2668 = vmul.f32 %v2667, 0.6931472
    %v2669 = vmul.f32 -0.5, %v2565
    %v2670 = vadd.f32 %v2669, 1.0
    %v2671 = vmul.f32 %v2670, %v2565
    %v2672 = vand.u32 2147483647, %v2565
    %vm2673 = vcmp.lt.f32.partialorder %v2672, 0.0004427343
    %v2674 = vsel %vm2673, %v2671, %v2668
    %v2675 = vadd.f32 %v2567, 1.0
    %v2676 = vlog2.pop %v2675
    %v2677 = vmul.f32 %v2676, 0.6931472
    %v2678 = vmul.f32 -0.5, %v2567
    %v2679 = vadd.f32 %v2678, 1.0
    %v2680 = vmul.f32 %v2679, %v2567
    %v2681 = vand.u32 2147483647, %v2567
    %vm2682 = vcmp.lt.f32.partialorder %v2681, 0.0004427343
    %v2683 = vsel %vm2682, %v2680, %v2677
    %v2684 = vadd.f32 %v2569, 1.0
    %v2685 = vlog2.pop %v2684
    %v2686 = vmul.f32 %v2685, 0.6931472
    %v2687 = vmul.f32 -0.5, %v2569
    %v2688 = vadd.f32 %v2687, 1.0
    %v2689 = vmul.f32 %v2688, %v2569
    %v2690 = vand.u32 2147483647, %v2569
    %vm2691 = vcmp.lt.f32.partialorder %v2690, 0.0004427343
    %v2692 = vsel %vm2691, %v2689, %v2686
    %v2693 = vadd.f32 %v2571, 1.0
    %v2694 = vlog2.pop %v2693
    %v2695 = vmul.f32 %v2694, 0.6931472
    %v2696 = vmul.f32 -0.5, %v2571
    %v2697 = vadd.f32 %v2696, 1.0
    %v2698 = vmul.f32 %v2697, %v2571
    %v2699 = vand.u32 2147483647, %v2571
    %vm2700 = vcmp.lt.f32.partialorder %v2699, 0.0004427343
    %v2701 = vsel %vm2700, %v2698, %v2695
    %v2702 = vadd.f32 %v2573, 1.0
    %v2703 = vlog2.pop %v2702
    %v2704 = vmul.f32 %v2703, 0.6931472
    %v2705 = vmul.f32 -0.5, %v2573
    %v2706 = vadd.f32 %v2705, 1.0
    %v2707 = vmul.f32 %v2706, %v2573
    %v2708 = vand.u32 2147483647, %v2573
    %vm2709 = vcmp.lt.f32.partialorder %v2708, 0.0004427343
    %v2710 = vsel %vm2709, %v2707, %v2704
    %v2711 = vadd.f32 %v2575, 1.0
    %v2712 = vlog2.pop %v2711
    %v2713 = vmul.f32 %v2712, 0.6931472
    %v2714 = vmul.f32 -0.5, %v2575
    %v2715 = vadd.f32 %v2714, 1.0
    %v2716 = vmul.f32 %v2715, %v2575
    %v2717 = vand.u32 2147483647, %v2575
    %vm2718 = vcmp.lt.f32.partialorder %v2717, 0.0004427343
    %v2719 = vsel %vm2718, %v2716, %v2713
    %v2720 = vadd.f32 %v2496, %v2584
    %v2721 = vadd.f32 %v2497, %v2593
    %v2722 = vadd.f32 %v2498, %v2602
    %v2723 = vadd.f32 %v2499, %v2611
    %v2724 = vadd.f32 %v2500, %v2620
    %v2725 = vadd.f32 %v2501, %v2629
    %v2726 = vadd.f32 %v2502, %v2638
    %v2727 = vadd.f32 %v2503, %v2647
    %v2728 = vadd.f32 %v2504, %v2656
    %v2729 = vadd.f32 %v2505, %v2665
    %v2730 = vadd.f32 %v2506, %v2674
    %v2731 = vadd.f32 %v2507, %v2683
    %v2732 = vadd.f32 %v2508, %v2692
    %v2733 = vadd.f32 %v2509, %v2701
    %v2734 = vadd.f32 %v2510, %v2710
    %v2735 = vadd.f32 %v2511, %v2719
    %2736 = vst [vmem:[#allocation2] sm:$0xff] %v2720
    %2737 = vst [vmem:[#allocation2 + $0x8] sm:$0xff] %v2721
    %2738 = vst [vmem:[#allocation2 + $0x10] sm:$0xff] %v2722
    %2739 = vst [vmem:[#allocation2 + $0x18] sm:$0xff] %v2723
    %2740 = vst [vmem:[#allocation2 + $0x20] sm:$0xff] %v2724
    %2741 = vst [vmem:[#allocation2 + $0x28] sm:$0xff] %v2725
    %2742 = vst [vmem:[#allocation2 + $0x30] sm:$0xff] %v2726
    %2743 = vst [vmem:[#allocation2 + $0x38] sm:$0xff] %v2727
    %2744 = vst [vmem:[#allocation2 + $0x40] sm:$0xff] %v2728
    %2745 = vst [vmem:[#allocation2 + $0x48] sm:$0xff] %v2729
    %2746 = vst [vmem:[#allocation2 + $0x50] sm:$0xff] %v2730
    %2747 = vst [vmem:[#allocation2 + $0x58] sm:$0xff] %v2731
    %2748 = vst [vmem:[#allocation2 + $0x60] sm:$0xff] %v2732
    %2749 = vst [vmem:[#allocation2 + $0x68] sm:$0xff] %v2733
    %2750 = vst [vmem:[#allocation2 + $0x70] sm:$0xff] %v2734
    %2751 = vst [vmem:[#allocation2 + $0x78] sm:$0xff] %v2735
    // Predicated region
    $region62: #{tpu_custom_call.1} parent=1 // pred_check
      _
    $region63: #{tpu_custom_call.1} parent=1 // pred_check_branch
      %2753 = sbr.rel (0) target = $region65
    $region64: #{tpu_custom_call.1} parent=1 // pred_region
      %2755 = vsyncadd [#allocation3], 0
      %s2756 = sshll.u32 [#allocation2], 4
      %s2757 = int_to_ptr.vmem [resolvable:$true] %s2756
      %s2758 = sshll.u32 %s15, 4
      %s2759 = int_to_ptr.hbm [resolvable:$true] %s2758
      %2764 = dma.vmem_to_hbm [thread:$0]  %s2757, 2048, %s2759, [#allocation3], 512, 512, 32
    $region65: #{tpu_custom_call.1} parent=1 // pred_fallthru
      _
    // Predicated region
    $region66: #{tpu_custom_call.1} parent=1 // pred_check
      _
    $region67: #{tpu_custom_call.1} parent=1 // pred_check_branch
      %2766 = sbr.rel (0) target = $region69
    $region68: #{tpu_custom_call.1} parent=1 // pred_region
      %2768 = dma.done [#allocation3], 2048
    $region69: #{tpu_custom_call.1} parent=1 // pred_fallthru
      _
    %2769 = vsyncpa [#allocation3], 1

</llo_original>
